<compile_context>
chip_gen: v7x
topology: tpu7x:2x2x1
jax: 0.10.0
libtpu: 0.0.40
codegen_flags: <defaults>
</compile_context>

<pallas_src>
import jax
import jax.numpy as jnp
from jax import lax
from jax.experimental import pallas as pl
from jax.experimental.pallas import tpu as pltpu

IN_EPS = 1e-3   # InstanceNorm2d eps in the PyTorch module
BN_EPS = 1e-5   # BatchNorm2d default eps


def diffpool_kernel(x_ref, w_ref, b_ref, scale_ref, shift_ref, out_ref):
    # x_ref     : (Bt, C, N) f32   batch tile
    # w_ref     : (K, C)     f32   1x1 conv weight (resident)
    # b_ref     : (K, 1)     f32   1x1 conv bias
    # scale_ref : (C, 1)     f32   folded BatchNorm scale
    # shift_ref : (C, 1)     f32   folded BatchNorm shift
    # out_ref   : (Bt, C, K) f32
    bt, _, n = x_ref.shape

    # Load shared operands once; reused by every unrolled batch iteration.
    w = w_ref[...]
    bias = b_ref[...]
    scale = scale_ref[...]
    shift = shift_ref[...]
    ones_row = jnp.ones((1, n), jnp.float32)        # hoisted, traced once

    nt_dims = (((1,), (1,)), ((), ()))              # contract last dims of both

    # Static unrolled loop over the batch tile (amortizes per-grid-step cost,
    # keeps the whole tile visible to the LLO scheduler).
    for b in range(bt):
        x = x_ref[b]                                             # (C, N)

        # ---- InstanceNorm2d (biased var over N) with BN scale folded into the
        #      inverse std (removes one full (C, N) multiply) ----
        mean = jnp.mean(x, axis=-1, keepdims=True)               # (C, 1) XLU
        xc = x - mean
        var = jnp.mean(xc * xc, axis=-1, keepdims=True)          # (C, 1) XLU
        inv = lax.rsqrt(var + IN_EPS) * scale                    # (C, 1) EUP rsqrt
        h = jnp.maximum(xc * inv + shift, 0.0)                   # BN shift + ReLU

        # ---- 1x1 Conv2d over channels: (K, C) @ (C, N) + bias -> (K, N) ----
        embed = jnp.dot(w, h, preferred_element_type=jnp.float32) + bias

        # ---- softmax over the point dimension, normalization deferred ----
        m = jnp.max(embed, axis=-1, keepdims=True)               # (K, 1) XLU
        e = jnp.exp(embed - m)                                   # (K, N) EUP, unnormalized

        # ---- x @ e^T in NT form (no explicit transpose), f32 accumulation ----
        acc = lax.dot_general(x, e, dimension_numbers=nt_dims,
                              preferred_element_type=jnp.float32)   # (C, K)

        # Row sums of e as a lane-oriented (1, K) row via a tiny MXU matmul.
        l_row = lax.dot_general(ones_row, e, dimension_numbers=nt_dims,
                                preferred_element_type=jnp.float32)  # (1, K)

        # Deferred normalization applied to the small (C, K) result; the store
        # is a full-lane (K = 128) unmasked vst.
        out_ref[b] = acc * (1.0 / l_row)


def diff_pool(x, conv_w, conv_b, bn_gamma, bn_beta, bn_rmean, bn_rvar,
              *, batch_tile=2, vmem_budget_bytes=24 << 20):
    """x: (B, C, N, 1); conv_w: (K, C, 1, 1); conv_b: (K,). Returns (B, C, K, 1)."""
    B, C, N, _ = x.shape
    K = conv_w.shape[0]

    # Batch tile: divide B, cap by a VMEM budget (double-buffered in + out
    # blocks), and keep >= 2 grid steps when possible so the "parallel" batch
    # axis can still be split across v7x's two TensorCores.
    per_b_bytes = 4 * 2 * (C * N + C * K)        # 2x double-buffering, in + out
    vmem_cap = max(1, vmem_budget_bytes // max(per_b_bytes, 1))
    bt = max(1, min(batch_tile, B, vmem_cap))
    while B % bt:
        bt -= 1

    x3 = x[..., 0].astype(jnp.float32)                       # (B, C, N)
    w2 = conv_w[:, :, 0, 0].astype(jnp.float32)              # (K, C)
    b2 = conv_b.reshape(K, 1).astype(jnp.float32)            # (K, 1)

    bn_scale = (bn_gamma / jnp.sqrt(bn_rvar + BN_EPS)).astype(jnp.float32)
    bn_shift = (bn_beta - bn_rmean * bn_scale).astype(jnp.float32)
    bn_scale = bn_scale.reshape(C, 1)
    bn_shift = bn_shift.reshape(C, 1)

    # Advisory cost hint (small, latency-bound kernel): two big matmuls + row sums.
    flops = 2 * B * (K * C * N + C * N * K + K * N)
    transcendentals = B * (K * N + C)                         # exp + rsqrt
    bytes_accessed = 4 * (B * C * N + K * C + K + 2 * C + B * C * K)

    out = pl.pallas_call(
        diffpool_kernel,
        out_shape=jax.ShapeDtypeStruct((B, C, K), jnp.float32),
        grid=(B // bt,),
        in_specs=[
            pl.BlockSpec((bt, C, N), lambda i: (i, 0, 0)),    # x, batch tile
            pl.BlockSpec((K, C), lambda i: (0, 0)),           # conv weight (resident)
            pl.BlockSpec((K, 1), lambda i: (0, 0)),           # conv bias
            pl.BlockSpec((C, 1), lambda i: (0, 0)),           # folded BN scale
            pl.BlockSpec((C, 1), lambda i: (0, 0)),           # folded BN shift
        ],
        out_specs=pl.BlockSpec((bt, C, K), lambda i: (i, 0, 0)),
        compiler_params=pltpu.CompilerParams(dimension_semantics=("parallel",)),
        cost_estimate=pl.CostEstimate(flops=flops,
                                      transcendentals=transcendentals,
                                      bytes_accessed=bytes_accessed),
    )(x3, w2, b2, bn_scale, bn_shift)

    return out[..., None]                                     # (B, C, K, 1)


def diff_pool_reference(x, conv_w, conv_b, bn_gamma, bn_beta, bn_rmean, bn_rvar):
    """Pure-JAX reference of the same forward pass (eval-mode BN)."""
    hp = lax.Precision.HIGHEST
    x3 = x[..., 0]
    mean = x3.mean(-1, keepdims=True)
    var = ((x3 - mean) ** 2).mean(-1, keepdims=True)
    h = (x3 - mean) / jnp.sqrt(var + IN_EPS)
    scale = bn_gamma / jnp.sqrt(bn_rvar + BN_EPS)
    shift = bn_beta - bn_rmean * scale
    h = jnp.maximum(h * scale[None, :, None] + shift[None, :, None], 0.0)
    embed = (jnp.einsum("kc,bcn->bkn", conv_w[:, :, 0, 0], h, precision=hp)
             + conv_b[None, :, None])
    S = jax.nn.softmax(embed, axis=-1)
    out = jnp.einsum("bcn,bkn->bck", x3, S, precision=hp)
    return out[..., None]


if __name__ == "__main__":
    key = jax.random.PRNGKey(0)
    # LMCNet builds DiffPool(in_channel=128, output_points=128); small B/N demo.
    B, C, N, K = 4, 128, 256, 128

    kx, kw, kb, kg, kbe, krm, krv = jax.random.split(key, 7)
    x = jax.random.normal(kx, (B, C, N, 1), dtype=jnp.float32)
    conv_w = 0.1 * jax.random.normal(kw, (K, C, 1, 1), dtype=jnp.float32)
    conv_b = 0.1 * jax.random.normal(kb, (K,), dtype=jnp.float32)

    # BatchNorm2d parameters / running stats (non-trivial, eval mode).
    bn_gamma = 1.0 + 0.1 * jax.random.normal(kg, (C,), dtype=jnp.float32)
    bn_beta = 0.1 * jax.random.normal(kbe, (C,), dtype=jnp.float32)
    bn_rmean = 0.1 * jax.random.normal(krm, (C,), dtype=jnp.float32)
    bn_rvar = 1.0 + 0.2 * jnp.abs(jax.random.normal(krv, (C,), dtype=jnp.float32))

    out = diff_pool(x, conv_w, conv_b, bn_gamma, bn_beta, bn_rmean, bn_rvar,
                    batch_tile=2)
    out = jax.block_until_ready(out)

    ref = diff_pool_reference(x, conv_w, conv_b, bn_gamma, bn_beta,
                              bn_rmean, bn_rvar)
    assert out.shape == (B, C, K, 1), out.shape
    assert bool(jnp.allclose(out, ref, rtol=2e-4, atol=2e-4)), "mismatch vs reference"

    print("KERNEL_OK")
</pallas_src>

<mosaic_0001>
module attributes {stable_mosaic.version = 11 : i64} {
  func.func @diffpool_kernel(%arg0: i32, %arg1: memref<2x128x256xf32, #tpu.memory_space<vmem>>, %arg2: memref<128x128xf32, #tpu.memory_space<vmem>>, %arg3: memref<128x1xf32, #tpu.memory_space<vmem>>, %arg4: memref<128x1xf32, #tpu.memory_space<vmem>>, %arg5: memref<128x1xf32, #tpu.memory_space<vmem>>, %arg6: memref<2x128x128xf32, #tpu.memory_space<vmem>>) attributes {dimension_semantics = [#tpu.dimension_semantics<parallel>], iteration_bounds = array<i64: 2>, scalar_prefetch = 0 : i64, scratch_operands = 0 : i64, tpu.core_type = #tpu.core_type<tc>, window_params = [{transform_indices = @transform_0, window_bounds = array<i64: 2, 128, 256>}, {pipeline_mode = #tpu.pipeline_mode<synchronous>, transform_indices = @transform_1, window_bounds = array<i64: 128, 128>}, {pipeline_mode = #tpu.pipeline_mode<synchronous>, transform_indices = @transform_2, window_bounds = array<i64: 128, 1>}, {pipeline_mode = #tpu.pipeline_mode<synchronous>, transform_indices = @transform_3, window_bounds = array<i64: 128, 1>}, {pipeline_mode = #tpu.pipeline_mode<synchronous>, transform_indices = @transform_4, window_bounds = array<i64: 128, 1>}, {transform_indices = @transform_5, window_bounds = array<i64: 2, 128, 128>}]} {
    %c0 = arith.constant 0 : index
    %c0_0 = arith.constant 0 : index
    %0 = vector.load %arg2[%c0, %c0_0] : memref<128x128xf32, #tpu.memory_space<vmem>>, vector<128x128xf32>
    %c0_1 = arith.constant 0 : index
    %c0_2 = arith.constant 0 : index
    %1 = vector.load %arg3[%c0_1, %c0_2] : memref<128x1xf32, #tpu.memory_space<vmem>>, vector<128x1xf32>
    %c0_3 = arith.constant 0 : index
    %c0_4 = arith.constant 0 : index
    %2 = vector.load %arg4[%c0_3, %c0_4] : memref<128x1xf32, #tpu.memory_space<vmem>>, vector<128x1xf32>
    %c0_5 = arith.constant 0 : index
    %c0_6 = arith.constant 0 : index
    %3 = vector.load %arg5[%c0_5, %c0_6] : memref<128x1xf32, #tpu.memory_space<vmem>>, vector<128x1xf32>
    %cst = arith.constant 1.000000e+00 : f32
    %4 = vector.broadcast %cst : f32 to vector<1x256xf32>
    %c0_7 = arith.constant 0 : index
    %c0_8 = arith.constant 0 : index
    %c0_9 = arith.constant 0 : index
    %5 = vector.load %arg1[%c0_7, %c0_8, %c0_9] : memref<2x128x256xf32, #tpu.memory_space<vmem>>, vector<1x128x256xf32>
    %6 = vector.shape_cast %5 : vector<1x128x256xf32> to vector<128x256xf32>
    %cst_10 = arith.constant dense<0.000000e+00> : vector<128xf32>
    %7 = vector.multi_reduction <add>, %6, %cst_10 [1] : vector<128x256xf32> to vector<128xf32>
    %8 = vector.shape_cast %7 : vector<128xf32> to vector<128x1xf32>
    %cst_11 = arith.constant 2.560000e+02 : f32
    %9 = vector.broadcast %cst_11 : f32 to vector<128x1xf32>
    %10 = arith.divf %8, %9 : vector<128x1xf32>
    %11 = vector.broadcast %10 : vector<128x1xf32> to vector<128x256xf32>
    %12 = arith.subf %6, %11 : vector<128x256xf32>
    %13 = arith.mulf %12, %12 : vector<128x256xf32>
    %cst_12 = arith.constant dense<0.000000e+00> : vector<128xf32>
    %14 = vector.multi_reduction <add>, %13, %cst_12 [1] : vector<128x256xf32> to vector<128xf32>
    %15 = vector.shape_cast %14 : vector<128xf32> to vector<128x1xf32>
    %cst_13 = arith.constant 2.560000e+02 : f32
    %16 = vector.broadcast %cst_13 : f32 to vector<128x1xf32>
    %17 = arith.divf %15, %16 : vector<128x1xf32>
    %cst_14 = arith.constant 1.000000e-03 : f32
    %18 = vector.broadcast %cst_14 : f32 to vector<128x1xf32>
    %19 = arith.addf %17, %18 : vector<128x1xf32>
    %20 = math.rsqrt %19 : vector<128x1xf32>
    %21 = arith.mulf %20, %2 : vector<128x1xf32>
    %22 = vector.broadcast %21 : vector<128x1xf32> to vector<128x256xf32>
    %23 = arith.mulf %12, %22 : vector<128x256xf32>
    %24 = vector.broadcast %3 : vector<128x1xf32> to vector<128x256xf32>
    %25 = arith.addf %23, %24 : vector<128x256xf32>
    %cst_15 = arith.constant 0.000000e+00 : f32
    %26 = vector.broadcast %cst_15 : f32 to vector<128x256xf32>
    %27 = arith.maximumf %25, %26 : vector<128x256xf32>
    %cst_16 = arith.constant dense<0.000000e+00> : vector<128x256xf32>
    %28 = tpu.matmul %0, %27, %cst_16 {dimension_numbers = #tpu.dot_dimension_numbers<[1], [0], [0], [1], [0, 0, 1, 1], [], []>} : vector<128x128xf32>, vector<128x256xf32>, vector<128x256xf32> -> vector<128x256xf32>
    %29 = vector.broadcast %1 : vector<128x1xf32> to vector<128x256xf32>
    %30 = arith.addf %28, %29 : vector<128x256xf32>
    %cst_17 = arith.constant dense<0xFF800000> : vector<128xf32>
    %31 = vector.multi_reduction <maximumf>, %30, %cst_17 [1] : vector<128x256xf32> to vector<128xf32>
    %32 = vector.shape_cast %31 : vector<128xf32> to vector<128x1xf32>
    %33 = vector.broadcast %32 : vector<128x1xf32> to vector<128x256xf32>
    %34 = arith.subf %30, %33 : vector<128x256xf32>
    %35 = math.exp %34 : vector<128x256xf32>
    %cst_18 = arith.constant dense<0.000000e+00> : vector<128x128xf32>
    %36 = tpu.matmul %6, %35, %cst_18 {dimension_numbers = #tpu.dot_dimension_numbers<[1], [1], [0], [0], [0, 0, 1, 0], [], []>} : vector<128x256xf32>, vector<128x256xf32>, vector<128x128xf32> -> vector<128x128xf32>
    %cst_19 = arith.constant dense<0.000000e+00> : vector<1x128xf32>
    %37 = tpu.matmul %4, %35, %cst_19 {dimension_numbers = #tpu.dot_dimension_numbers<[1], [1], [0], [0], [0, 0, 1, 0], [], []>} : vector<1x256xf32>, vector<128x256xf32>, vector<1x128xf32> -> vector<1x128xf32>
    %cst_20 = arith.constant 1.000000e+00 : f32
    %38 = vector.broadcast %cst_20 : f32 to vector<1x128xf32>
    %39 = arith.divf %38, %37 : vector<1x128xf32>
    %40 = vector.broadcast %39 : vector<1x128xf32> to vector<128x128xf32>
    %41 = arith.mulf %36, %40 : vector<128x128xf32>
    %c0_21 = arith.constant 0 : index
    %c0_22 = arith.constant 0 : index
    %c0_23 = arith.constant 0 : index
    %42 = vector.load %arg6[%c0_21, %c0_22, %c0_23] : memref<2x128x128xf32, #tpu.memory_space<vmem>>, vector<1x128x128xf32>
    %43 = vector.shape_cast %42 : vector<1x128x128xf32> to vector<128x128xf32>
    %44 = vector.shape_cast %41 : vector<128x128xf32> to vector<1x128x128xf32>
    tpu.vector_store %arg6[%c0_21, %c0_22, %c0_23], %44 {strides = array<i32>} : memref<2x128x128xf32, #tpu.memory_space<vmem>>, vector<1x128x128xf32>,
    %c1 = arith.constant 1 : index
    %c0_24 = arith.constant 0 : index
    %c0_25 = arith.constant 0 : index
    %45 = vector.load %arg1[%c1, %c0_24, %c0_25] : memref<2x128x256xf32, #tpu.memory_space<vmem>>, vector<1x128x256xf32>
    %46 = vector.shape_cast %45 : vector<1x128x256xf32> to vector<128x256xf32>
    %cst_26 = arith.constant dense<0.000000e+00> : vector<128xf32>
    %47 = vector.multi_reduction <add>, %46, %cst_26 [1] : vector<128x256xf32> to vector<128xf32>
    %48 = vector.shape_cast %47 : vector<128xf32> to vector<128x1xf32>
    %cst_27 = arith.constant 2.560000e+02 : f32
    %49 = vector.broadcast %cst_27 : f32 to vector<128x1xf32>
    %50 = arith.divf %48, %49 : vector<128x1xf32>
    %51 = vector.broadcast %50 : vector<128x1xf32> to vector<128x256xf32>
    %52 = arith.subf %46, %51 : vector<128x256xf32>
    %53 = arith.mulf %52, %52 : vector<128x256xf32>
    %cst_28 = arith.constant dense<0.000000e+00> : vector<128xf32>
    %54 = vector.multi_reduction <add>, %53, %cst_28 [1] : vector<128x256xf32> to vector<128xf32>
    %55 = vector.shape_cast %54 : vector<128xf32> to vector<128x1xf32>
    %cst_29 = arith.constant 2.560000e+02 : f32
    %56 = vector.broadcast %cst_29 : f32 to vector<128x1xf32>
    %57 = arith.divf %55, %56 : vector<128x1xf32>
    %cst_30 = arith.constant 1.000000e-03 : f32
    %58 = vector.broadcast %cst_30 : f32 to vector<128x1xf32>
    %59 = arith.addf %57, %58 : vector<128x1xf32>
    %60 = math.rsqrt %59 : vector<128x1xf32>
    %61 = arith.mulf %60, %2 : vector<128x1xf32>
    %62 = vector.broadcast %61 : vector<128x1xf32> to vector<128x256xf32>
    %63 = arith.mulf %52, %62 : vector<128x256xf32>
    %64 = vector.broadcast %3 : vector<128x1xf32> to vector<128x256xf32>
    %65 = arith.addf %63, %64 : vector<128x256xf32>
    %cst_31 = arith.constant 0.000000e+00 : f32
    %66 = vector.broadcast %cst_31 : f32 to vector<128x256xf32>
    %67 = arith.maximumf %65, %66 : vector<128x256xf32>
    %cst_32 = arith.constant dense<0.000000e+00> : vector<128x256xf32>
    %68 = tpu.matmul %0, %67, %cst_32 {dimension_numbers = #tpu.dot_dimension_numbers<[1], [0], [0], [1], [0, 0, 1, 1], [], []>} : vector<128x128xf32>, vector<128x256xf32>, vector<128x256xf32> -> vector<128x256xf32>
    %69 = vector.broadcast %1 : vector<128x1xf32> to vector<128x256xf32>
    %70 = arith.addf %68, %69 : vector<128x256xf32>
    %cst_33 = arith.constant dense<0xFF800000> : vector<128xf32>
    %71 = vector.multi_reduction <maximumf>, %70, %cst_33 [1] : vector<128x256xf32> to vector<128xf32>
    %72 = vector.shape_cast %71 : vector<128xf32> to vector<128x1xf32>
    %73 = vector.broadcast %72 : vector<128x1xf32> to vector<128x256xf32>
    %74 = arith.subf %70, %73 : vector<128x256xf32>
    %75 = math.exp %74 : vector<128x256xf32>
    %cst_34 = arith.constant dense<0.000000e+00> : vector<128x128xf32>
    %76 = tpu.matmul %46, %75, %cst_34 {dimension_numbers = #tpu.dot_dimension_numbers<[1], [1], [0], [0], [0, 0, 1, 0], [], []>} : vector<128x256xf32>, vector<128x256xf32>, vector<128x128xf32> -> vector<128x128xf32>
    %cst_35 = arith.constant dense<0.000000e+00> : vector<1x128xf32>
    %77 = tpu.matmul %4, %75, %cst_35 {dimension_numbers = #tpu.dot_dimension_numbers<[1], [1], [0], [0], [0, 0, 1, 0], [], []>} : vector<1x256xf32>, vector<128x256xf32>, vector<1x128xf32> -> vector<1x128xf32>
    %cst_36 = arith.constant 1.000000e+00 : f32
    %78 = vector.broadcast %cst_36 : f32 to vector<1x128xf32>
    %79 = arith.divf %78, %77 : vector<1x128xf32>
    %80 = vector.broadcast %79 : vector<1x128xf32> to vector<128x128xf32>
    %81 = arith.mulf %76, %80 : vector<128x128xf32>
    %c1_37 = arith.constant 1 : index
    %c0_38 = arith.constant 0 : index
    %c0_39 = arith.constant 0 : index
    %82 = vector.load %arg6[%c1_37, %c0_38, %c0_39] : memref<2x128x128xf32, #tpu.memory_space<vmem>>, vector<1x128x128xf32>
    %83 = vector.shape_cast %82 : vector<1x128x128xf32> to vector<128x128xf32>
    %84 = vector.shape_cast %81 : vector<128x128xf32> to vector<1x128x128xf32>
    tpu.vector_store %arg6[%c1_37, %c0_38, %c0_39], %84 {strides = array<i32>} : memref<2x128x128xf32, #tpu.memory_space<vmem>>, vector<1x128x128xf32>,
    return
  }
  func.func @transform_0(%arg0: i32) -> (i32, i32, i32) {
    %c0_i32 = arith.constant 0 : i32
    %c0_i32_0 = arith.constant 0 : i32
    %c0_i32_1 = arith.constant 0 : i32
    return %arg0, %c0_i32, %c0_i32_0 : i32, i32, i32
  }
  func.func @transform_1(%arg0: i32) -> (i32, i32) {
    %c0_i32 = arith.constant 0 : i32
    %c0_i32_0 = arith.constant 0 : i32
    %c0_i32_1 = arith.constant 0 : i32
    return %c0_i32, %c0_i32_0 : i32, i32
  }
  func.func @transform_2(%arg0: i32) -> (i32, i32) {
    %c0_i32 = arith.constant 0 : i32
    %c0_i32_0 = arith.constant 0 : i32
    %c0_i32_1 = arith.constant 0 : i32
    return %c0_i32, %c0_i32_0 : i32, i32
  }
  func.func @transform_3(%arg0: i32) -> (i32, i32) {
    %c0_i32 = arith.constant 0 : i32
    %c0_i32_0 = arith.constant 0 : i32
    %c0_i32_1 = arith.constant 0 : i32
    return %c0_i32, %c0_i32_0 : i32, i32
  }
  func.func @transform_4(%arg0: i32) -> (i32, i32) {
    %c0_i32 = arith.constant 0 : i32
    %c0_i32_0 = arith.constant 0 : i32
    %c0_i32_1 = arith.constant 0 : i32
    return %c0_i32, %c0_i32_0 : i32, i32
  }
  func.func @transform_5(%arg0: i32) -> (i32, i32, i32) {
    %c0_i32 = arith.constant 0 : i32
    %c0_i32_0 = arith.constant 0 : i32
    %c0_i32_1 = arith.constant 0 : i32
    return %arg0, %c0_i32, %c0_i32_0 : i32, i32, i32
  }
}

</mosaic_0001>

<llo_original>
// kernel: tpu_custom_call.1
$region0: #{tpu_custom_call.1}
  #allocation0 [shape = 'u32[]', space=smem, size = 0x4, offset = 0x4, fixed_abs, tag = 'smem constant byte address 0x4 - core index']
  #allocation1 [shape = 'u32[144,128]{1,0:T(1,128)}', space=vmem, size = 0x12000, scoped, tag = 'internal scratch']
  %s0 = inlined_call_operand.hbm [shape: f32[4,128,256], index: 0, kind: input, shape index: {}]
  %s1 = inlined_call_operand.vmem [shape: f32[128,128], index: 1, kind: input, shape index: {}]
  %s2 = inlined_call_operand.vmem [shape: f32[128,1], index: 2, kind: input, shape index: {}]
  %s3 = inlined_call_operand.vmem [shape: f32[128,1], index: 3, kind: input, shape index: {}]
  %s4 = inlined_call_operand.vmem [shape: f32[128,1], index: 4, kind: input, shape index: {}]
  %s5 = inlined_call_operand.hbm [shape: f32[4,128,128], index: 5, kind: output, shape index: {}]
  %s6 = sld [smem:[#allocation0]]
  $region57: #{tpu_custom_call.1} parent=0
    _
  %s8 = ssub.s32 1, %s6
  %s9 = scalar_select 0, %s8, %s6
  $region1: #{tpu_custom_call.1} parent=0
    #allocation2 [shape = 'u8[524288]{0}', space=vmem, size = 0x80000, scoped, tag = 'input window, operand 0']
    #allocation3 [shape = 's32[2]{0}', space=sflag, size = 0x8, scoped, tag = 'scoped memory for tpu_custom_call.1']
    #allocation4 [shape = 's32[2]{0}', space=sflag, size = 0x8, scoped, tag = 'scoped memory for tpu_custom_call.1']
    #allocation5 [shape = 'u8[262144]{0}', space=vmem, size = 0x40000, scoped, tag = 'output window, operand 0']
    %10 = vsyncpa [#allocation3], 0
    %s11 = scalar_lea.sflag [#allocation3], 1
    %12 = vsyncpa %s11, 0
    %13 = vsyncpa [#allocation4], 0
    %s14 = scalar_lea.sflag [#allocation4], 1
    %15 = vsyncpa %s14, 0
    loop: start=0, step=1, limit=4
    $region2: #{tpu_custom_call.1} parent=1 // loop_pre_header
      _
    $region3: #{tpu_custom_call.1} parent=1 // loop_header
      %s17 = sphi 0, %s21
      %p18 = scmp.ge.s32.totalorder %s17, 4
      %s27 = sphi 0, %s29
      %s30 = sphi 0, %s27
      %s31 = sphi 0, %s30
      %s47 = sphi 0, %s31
      %s51 = sphi 0, %s51
      %s53 = sphi 0, %s51
      %s54 = sphi 0, %s53
      %s68 = sphi 0, %s54
      %s72 = sphi 0, %s72
      %s74 = sphi 0, %s72
      %s75 = sphi 0, %s74
      %s89 = sphi 0, %s75
      %s93 = sphi 0, %s93
      %s95 = sphi 0, %s93
      %s96 = sphi 0, %s95
      %s110 = sphi 0, %s96
      %s114 = sphi 0, %s114
      %s116 = sphi 0, %s114
      %s117 = sphi 0, %s116
      %s131 = sphi 0, %s117
      %s137 = sphi 0, %s139
      %s140 = sphi 0, %s137
      %s141 = sphi 0, %s140
      %s157 = sphi 0, %s141
    $region4: #{tpu_custom_call.1} parent=1 // loop_header_branch
      %20 = sbr.rel (%p18) target = $region8
    $region5: #{tpu_custom_call.1} parent=1 // loop_body
      %s22 = ssub.s32 %s17, 1
      %s23 = ssub.s32 %s17, 2
      %s24 = sadd.s32 %s17, 1
      %s25 = ssub.s32 %s17, %s24
      %p26 = scmp.eq.s32.totalorder %s25, 0
      %s28 = sadd.s32 %s27, 1
      %s29 = scalar_select %p26, %s27, %s28
      %p32 = pneg %p26
      %p33 = scmp.eq.s32.totalorder %s17, 1
      %p34 = por %p32, %p33
      %p35 = scmp.ne.s32.totalorder %s27, %s30
      %p36 = scmp.eq.s32.totalorder %s17, 0
      %p37 = por %p35, %p36
      %p38 = scmp.ne.s32.totalorder %s27, %s30
      %p39 = scmp.eq.s32.totalorder %s22, 1
      %p40 = por %p38, %p39
      %p41 = scmp.ne.s32.totalorder %s30, %s31
      %p42 = scmp.eq.s32.totalorder %s22, 0
      %p43 = por %p41, %p42
      %p44 = scmp.ne.s32.totalorder %s30, %s31
      %p45 = scmp.eq.s32.totalorder %s23, 1
      %p46 = por %p44, %p45
      %p48 = scmp.ne.s32.totalorder %s31, %s47
      %p49 = scmp.eq.s32.totalorder %s23, 0
      %p50 = por %p48, %p49
      %s52 = sadd.s32 %s51, 1
      %p55 = scmp.eq.s32.totalorder %s17, 1
      %p56 = scmp.ne.s32.totalorder %s51, %s53
      %p57 = scmp.eq.s32.totalorder %s17, 0
      %p58 = por %p56, %p57
      %p59 = scmp.ne.s32.totalorder %s51, %s53
      %p60 = scmp.eq.s32.totalorder %s22, 1
      %p61 = por %p59, %p60
      %p62 = scmp.ne.s32.totalorder %s53, %s54
      %p63 = scmp.eq.s32.totalorder %s22, 0
      %p64 = por %p62, %p63
      %p65 = scmp.ne.s32.totalorder %s53, %s54
      %p66 = scmp.eq.s32.totalorder %s23, 1
      %p67 = por %p65, %p66
      %p69 = scmp.ne.s32.totalorder %s54, %s68
      %p70 = scmp.eq.s32.totalorder %s23, 0
      %p71 = por %p69, %p70
      %s73 = sadd.s32 %s72, 1
      %p76 = scmp.eq.s32.totalorder %s17, 1
      %p77 = scmp.ne.s32.totalorder %s72, %s74
      %p78 = scmp.eq.s32.totalorder %s17, 0
      %p79 = por %p77, %p78
      %p80 = scmp.ne.s32.totalorder %s72, %s74
      %p81 = scmp.eq.s32.totalorder %s22, 1
      %p82 = por %p80, %p81
      %p83 = scmp.ne.s32.totalorder %s74, %s75
      %p84 = scmp.eq.s32.totalorder %s22, 0
      %p85 = por %p83, %p84
      %p86 = scmp.ne.s32.totalorder %s74, %s75
      %p87 = scmp.eq.s32.totalorder %s23, 1
      %p88 = por %p86, %p87
      %p90 = scmp.ne.s32.totalorder %s75, %s89
      %p91 = scmp.eq.s32.totalorder %s23, 0
      %p92 = por %p90, %p91
      %s94 = sadd.s32 %s93, 1
      %p97 = scmp.eq.s32.totalorder %s17, 1
      %p98 = scmp.ne.s32.totalorder %s93, %s95
      %p99 = scmp.eq.s32.totalorder %s17, 0
      %p100 = por %p98, %p99
      %p101 = scmp.ne.s32.totalorder %s93, %s95
      %p102 = scmp.eq.s32.totalorder %s22, 1
      %p103 = por %p101, %p102
      %p104 = scmp.ne.s32.totalorder %s95, %s96
      %p105 = scmp.eq.s32.totalorder %s22, 0
      %p106 = por %p104, %p105
      %p107 = scmp.ne.s32.totalorder %s95, %s96
      %p108 = scmp.eq.s32.totalorder %s23, 1
      %p109 = por %p107, %p108
      %p111 = scmp.ne.s32.totalorder %s96, %s110
      %p112 = scmp.eq.s32.totalorder %s23, 0
      %p113 = por %p111, %p112
      %s115 = sadd.s32 %s114, 1
      %p118 = scmp.eq.s32.totalorder %s17, 1
      %p119 = scmp.ne.s32.totalorder %s114, %s116
      %p120 = scmp.eq.s32.totalorder %s17, 0
      %p121 = por %p119, %p120
      %p122 = scmp.ne.s32.totalorder %s114, %s116
      %p123 = scmp.eq.s32.totalorder %s22, 1
      %p124 = por %p122, %p123
      %p125 = scmp.ne.s32.totalorder %s116, %s117
      %p126 = scmp.eq.s32.totalorder %s22, 0
      %p127 = por %p125, %p126
      %p128 = scmp.ne.s32.totalorder %s116, %s117
      %p129 = scmp.eq.s32.totalorder %s23, 1
      %p130 = por %p128, %p129
      %p132 = scmp.ne.s32.totalorder %s117, %s131
      %p133 = scmp.eq.s32.totalorder %s23, 0
      %p134 = por %p132, %p133
      %s135 = ssub.s32 %s17, %s24
      %p136 = scmp.eq.s32.totalorder %s135, 0
      %s138 = sadd.s32 %s137, 1
      %s139 = scalar_select %p136, %s137, %s138
      %p142 = pneg %p136
      %p143 = scmp.eq.s32.totalorder %s17, 1
      %p144 = por %p142, %p143
      %p145 = scmp.ne.s32.totalorder %s137, %s140
      %p146 = scmp.eq.s32.totalorder %s17, 0
      %p147 = por %p145, %p146
      %p148 = scmp.ne.s32.totalorder %s137, %s140
      %p149 = scmp.eq.s32.totalorder %s22, 1
      %p150 = por %p148, %p149
      %p151 = scmp.ne.s32.totalorder %s140, %s141
      %p152 = scmp.eq.s32.totalorder %s22, 0
      %p153 = por %p151, %p152
      %p154 = scmp.ne.s32.totalorder %s140, %s141
      %p155 = scmp.eq.s32.totalorder %s23, 1
      %p156 = por %p154, %p155
      %p158 = scmp.ne.s32.totalorder %s141, %s157
      %p159 = scmp.eq.s32.totalorder %s23, 0
      %p160 = por %p158, %p159
      %p161 = scmp.le.s32.totalorder 1, %s17
      %p162 = scmp.lt.s32.totalorder %s17, 3
      %p163 = pnand %p161, %p162
      %p164 = pneg %p163
      // Predicated region
      $region9: #{tpu_custom_call.1} parent=5 // pred_check
        _
      $region10: #{tpu_custom_call.1} parent=5 // pred_check_branch
        %166 = sbr.rel (%p163) target = $region12
      $region11: #{tpu_custom_call.1} parent=5 // pred_region
        %s167 = ssub.s32 %s17, 1
        // Predicated region
        $region13: #{tpu_custom_call.1} parent=11 // pred_check
          %p168 = pneg %p64
        $region14: #{tpu_custom_call.1} parent=11 // pred_check_branch
          %170 = sbr.rel (%p168) target = $region16
        $region15: #{tpu_custom_call.1} parent=11 // pred_region
          _
        $region16: #{tpu_custom_call.1} parent=11 // pred_fallthru
          _
        // Predicated region
        $region17: #{tpu_custom_call.1} parent=11 // pred_check
          %p171 = pneg %p85
        $region18: #{tpu_custom_call.1} parent=11 // pred_check_branch
          %173 = sbr.rel (%p171) target = $region20
        $region19: #{tpu_custom_call.1} parent=11 // pred_region
          _
        $region20: #{tpu_custom_call.1} parent=11 // pred_fallthru
          _
        // Predicated region
        $region21: #{tpu_custom_call.1} parent=11 // pred_check
          %p174 = pneg %p106
        $region22: #{tpu_custom_call.1} parent=11 // pred_check_branch
          %176 = sbr.rel (%p174) target = $region24
        $region23: #{tpu_custom_call.1} parent=11 // pred_region
          _
        $region24: #{tpu_custom_call.1} parent=11 // pred_fallthru
          _
        // Predicated region
        $region25: #{tpu_custom_call.1} parent=11 // pred_check
          %p177 = pneg %p127
        $region26: #{tpu_custom_call.1} parent=11 // pred_check_branch
          %179 = sbr.rel (%p177) target = $region28
        $region27: #{tpu_custom_call.1} parent=11 // pred_region
          _
        $region28: #{tpu_custom_call.1} parent=11 // pred_fallthru
          _
      $region12: #{tpu_custom_call.1} parent=5 // pred_fallthru
        _
      %p180 = scmp.lt.s32.totalorder %s17, 2
      // Predicated region
      $region29: #{tpu_custom_call.1} parent=5 // pred_check
        %p181 = pneg %p180
      $region30: #{tpu_custom_call.1} parent=5 // pred_check_branch
        %183 = sbr.rel (%p181) target = $region32
      $region31: #{tpu_custom_call.1} parent=5 // pred_region
        // Predicated region
        $region33: #{tpu_custom_call.1} parent=31 // pred_check
          %p184 = pneg %p37
        $region34: #{tpu_custom_call.1} parent=31 // pred_check_branch
          %186 = sbr.rel (%p184) target = $region36
        $region35: #{tpu_custom_call.1} parent=31 // pred_region
          %s187 = sand.u32 %s27, 1
          %s188 = scalar_lea.sflag [#allocation3], %s187
          %s189 = sand.u32 %s27, 1
          %s190 = smul.addr %s189, 512
          %s191 = scalar_lea.vmem [#allocation2], %s190
          %s192 = smul.u32 2, %s17
          %s194 = ssub.s32 8192, 8192
          %195 = vsyncadd %s188, %s194
          %s196 = smul.addr %s192, 32
          %s197 = smul.addr %s196, 128
          %s198 = scalar_lea.hbm %s0, %s197
          %s199 = sshll.u32 %s191, 4
          %s200 = int_to_ptr.vmem [resolvable:$true] %s199
          %205 = dma.hbm_to_vmem [thread:$0]  %s198, 8192, %s200, %s188, 256, 256, 16
        $region36: #{tpu_custom_call.1} parent=31 // pred_fallthru
          _
      $region32: #{tpu_custom_call.1} parent=5 // pred_fallthru
        _
      %p206 = scmp.le.s32.totalorder 1, %s17
      %p207 = scmp.lt.s32.totalorder %s17, 3
      %p208 = pnand %p206, %p207
      %p209 = pneg %p208
      // Predicated region
      $region37: #{tpu_custom_call.1} parent=5 // pred_check
        _
      $region38: #{tpu_custom_call.1} parent=5 // pred_check_branch
        %211 = sbr.rel (%p208) target = $region40
      $region39: #{tpu_custom_call.1} parent=5 // pred_region
        %s212 = ssub.s32 %s17, 1
        %s213 = sand.u32 %s30, 1
        %s214 = scalar_lea.sflag [#allocation3], %s213
        %s215 = sand.u32 %s30, 1
        %s216 = smul.addr %s215, 512
        %s217 = scalar_lea.vmem [#allocation2], %s216
        // Predicated region
        $region41: #{tpu_custom_call.1} parent=39 // pred_check
          %p218 = pneg %p43
        $region42: #{tpu_custom_call.1} parent=39 // pred_check_branch
          %220 = sbr.rel (%p218) target = $region44
        $region43: #{tpu_custom_call.1} parent=39 // pred_region
          %221 = dma.done %s214, 8192
        $region44: #{tpu_custom_call.1} parent=39 // pred_fallthru
          _
        %s222 = sand.u32 %s30, 1
        %s223 = scalar_lea.sflag [#allocation3], %s222
        %s224 = sand.u32 %s30, 1
        %s225 = smul.addr %s224, 512
        %s226 = scalar_lea.vmem [#allocation2], %s225
        %p227 = pneg %p43
        %p228 = pneg %p40
        %p229 = pneg %p64
        %p230 = pneg %p61
        %p231 = pneg %p85
        %p232 = pneg %p82
        %p233 = pneg %p106
        %p234 = pneg %p103
        %p235 = pneg %p127
        %p236 = pneg %p124
        %p237 = pneg %p153
        %p238 = pneg %p150
        %s239 = sand.u32 %s140, 1
        %s240 = scalar_lea.sflag [#allocation4], %s239
        %s241 = sand.u32 %s140, 1
        %s242 = smul.addr %s241, 256
        %s243 = scalar_lea.vmem [#allocation5], %s242
        %s244 = smul.u32 2, %s22
        %s245 = smul.u32 2, %s22
        %v246 = vld [vmem:[%s1] sm:$0xff]
        %v247 = vld [vmem:[%s1 + $0x8] sm:$0xff]
        %v248 = vld [vmem:[%s1 + $0x10] sm:$0xff]
        %v249 = vld [vmem:[%s1 + $0x18] sm:$0xff]
        %v250 = vld [vmem:[%s1 + $0x20] sm:$0xff]
        %v251 = vld [vmem:[%s1 + $0x28] sm:$0xff]
        %v252 = vld [vmem:[%s1 + $0x30] sm:$0xff]
        %v253 = vld [vmem:[%s1 + $0x38] sm:$0xff]
        %v254 = vld [vmem:[%s1 + $0x40] sm:$0xff]
        %v255 = vld [vmem:[%s1 + $0x48] sm:$0xff]
        %v256 = vld [vmem:[%s1 + $0x50] sm:$0xff]
        %v257 = vld [vmem:[%s1 + $0x58] sm:$0xff]
        %v258 = vld [vmem:[%s1 + $0x60] sm:$0xff]
        %v259 = vld [vmem:[%s1 + $0x68] sm:$0xff]
        %v260 = vld [vmem:[%s1 + $0x70] sm:$0xff]
        %v261 = vld [vmem:[%s1 + $0x78] sm:$0xff]
        %v262 = vld [vmem:[%s2] sm:$0xff]
        %v263 = vld [vmem:[%s2 + $0x8] sm:$0xff]
        %v264 = vld [vmem:[%s2 + $0x10] sm:$0xff]
        %v265 = vld [vmem:[%s2 + $0x18] sm:$0xff]
        %v266 = vld [vmem:[%s2 + $0x20] sm:$0xff]
        %v267 = vld [vmem:[%s2 + $0x28] sm:$0xff]
        %v268 = vld [vmem:[%s2 + $0x30] sm:$0xff]
        %v269 = vld [vmem:[%s2 + $0x38] sm:$0xff]
        %v270 = vld [vmem:[%s2 + $0x40] sm:$0xff]
        %v271 = vld [vmem:[%s2 + $0x48] sm:$0xff]
        %v272 = vld [vmem:[%s2 + $0x50] sm:$0xff]
        %v273 = vld [vmem:[%s2 + $0x58] sm:$0xff]
        %v274 = vld [vmem:[%s2 + $0x60] sm:$0xff]
        %v275 = vld [vmem:[%s2 + $0x68] sm:$0xff]
        %v276 = vld [vmem:[%s2 + $0x70] sm:$0xff]
        %v277 = vld [vmem:[%s2 + $0x78] sm:$0xff]
        %v278 = vld [vmem:[%s3] sm:$0xff]
        %v279 = vld [vmem:[%s3 + $0x8] sm:$0xff]
        %v280 = vld [vmem:[%s3 + $0x10] sm:$0xff]
        %v281 = vld [vmem:[%s3 + $0x18] sm:$0xff]
        %v282 = vld [vmem:[%s3 + $0x20] sm:$0xff]
        %v283 = vld [vmem:[%s3 + $0x28] sm:$0xff]
        %v284 = vld [vmem:[%s3 + $0x30] sm:$0xff]
        %v285 = vld [vmem:[%s3 + $0x38] sm:$0xff]
        %v286 = vld [vmem:[%s3 + $0x40] sm:$0xff]
        %v287 = vld [vmem:[%s3 + $0x48] sm:$0xff]
        %v288 = vld [vmem:[%s3 + $0x50] sm:$0xff]
        %v289 = vld [vmem:[%s3 + $0x58] sm:$0xff]
        %v290 = vld [vmem:[%s3 + $0x60] sm:$0xff]
        %v291 = vld [vmem:[%s3 + $0x68] sm:$0xff]
        %v292 = vld [vmem:[%s3 + $0x70] sm:$0xff]
        %v293 = vld [vmem:[%s3 + $0x78] sm:$0xff]
        %v294 = vld [vmem:[%s4] sm:$0xff]
        %v295 = vld [vmem:[%s4 + $0x8] sm:$0xff]
        %v296 = vld [vmem:[%s4 + $0x10] sm:$0xff]
        %v297 = vld [vmem:[%s4 + $0x18] sm:$0xff]
        %v298 = vld [vmem:[%s4 + $0x20] sm:$0xff]
        %v299 = vld [vmem:[%s4 + $0x28] sm:$0xff]
        %v300 = vld [vmem:[%s4 + $0x30] sm:$0xff]
        %v301 = vld [vmem:[%s4 + $0x38] sm:$0xff]
        %v302 = vld [vmem:[%s4 + $0x40] sm:$0xff]
        %v303 = vld [vmem:[%s4 + $0x48] sm:$0xff]
        %v304 = vld [vmem:[%s4 + $0x50] sm:$0xff]
        %v305 = vld [vmem:[%s4 + $0x58] sm:$0xff]
        %v306 = vld [vmem:[%s4 + $0x60] sm:$0xff]
        %v307 = vld [vmem:[%s4 + $0x68] sm:$0xff]
        %v308 = vld [vmem:[%s4 + $0x70] sm:$0xff]
        %v309 = vld [vmem:[%s4 + $0x78] sm:$0xff]
        %v310 = vld [vmem:[%s217] sm:$0xff]
        %v311 = vld [vmem:[%s217 + $0x8] sm:$0xff]
        %v312 = vld [vmem:[%s217 + $0x10] sm:$0xff]
        %v313 = vld [vmem:[%s217 + $0x18] sm:$0xff]
        %v314 = vld [vmem:[%s217 + $0x20] sm:$0xff]
        %v315 = vld [vmem:[%s217 + $0x28] sm:$0xff]
        %v316 = vld [vmem:[%s217 + $0x30] sm:$0xff]
        %v317 = vld [vmem:[%s217 + $0x38] sm:$0xff]
        %v318 = vld [vmem:[%s217 + $0x40] sm:$0xff]
        %v319 = vld [vmem:[%s217 + $0x48] sm:$0xff]
        %v320 = vld [vmem:[%s217 + $0x50] sm:$0xff]
        %v321 = vld [vmem:[%s217 + $0x58] sm:$0xff]
        %v322 = vld [vmem:[%s217 + $0x60] sm:$0xff]
        %v323 = vld [vmem:[%s217 + $0x68] sm:$0xff]
        %v324 = vld [vmem:[%s217 + $0x70] sm:$0xff]
        %v325 = vld [vmem:[%s217 + $0x78] sm:$0xff]
        %v326 = vld [vmem:[%s217 + $0x80] sm:$0xff]
        %v327 = vld [vmem:[%s217 + $0x88] sm:$0xff]
        %v328 = vld [vmem:[%s217 + $0x90] sm:$0xff]
        %v329 = vld [vmem:[%s217 + $0x98] sm:$0xff]
        %v330 = vld [vmem:[%s217 + $0xa0] sm:$0xff]
        %v331 = vld [vmem:[%s217 + $0xa8] sm:$0xff]
        %v332 = vld [vmem:[%s217 + $0xb0] sm:$0xff]
        %v333 = vld [vmem:[%s217 + $0xb8] sm:$0xff]
        %v334 = vld [vmem:[%s217 + $0xc0] sm:$0xff]
        %v335 = vld [vmem:[%s217 + $0xc8] sm:$0xff]
        %v336 = vld [vmem:[%s217 + $0xd0] sm:$0xff]
        %v337 = vld [vmem:[%s217 + $0xd8] sm:$0xff]
        %v338 = vld [vmem:[%s217 + $0xe0] sm:$0xff]
        %v339 = vld [vmem:[%s217 + $0xe8] sm:$0xff]
        %v340 = vld [vmem:[%s217 + $0xf0] sm:$0xff]
        %v341 = vld [vmem:[%s217 + $0xf8] sm:$0xff]
        %v342 = vadd.f32 %v310, %v311
        %343 = vadd.xlane.f32.xlu0 %v342
        %v344 = vpop.xlane.xlu0 %343
        %v345 = vadd.f32 %v312, %v313
        %346 = vadd.xlane.f32.xlu0 %v345
        %v347 = vpop.xlane.xlu0 %346
        %v348 = vadd.f32 %v314, %v315
        %349 = vadd.xlane.f32.xlu0 %v348
        %v350 = vpop.xlane.xlu0 %349
        %v351 = vadd.f32 %v316, %v317
        %352 = vadd.xlane.f32.xlu0 %v351
        %v353 = vpop.xlane.xlu0 %352
        %v354 = vadd.f32 %v318, %v319
        %355 = vadd.xlane.f32.xlu0 %v354
        %v356 = vpop.xlane.xlu0 %355
        %v357 = vadd.f32 %v320, %v321
        %358 = vadd.xlane.f32.xlu0 %v357
        %v359 = vpop.xlane.xlu0 %358
        %v360 = vadd.f32 %v322, %v323
        %361 = vadd.xlane.f32.xlu0 %v360
        %v362 = vpop.xlane.xlu0 %361
        %v363 = vadd.f32 %v324, %v325
        %364 = vadd.xlane.f32.xlu0 %v363
        %v365 = vpop.xlane.xlu0 %364
        %v366 = vadd.f32 %v326, %v327
        %367 = vadd.xlane.f32.xlu0 %v366
        %v368 = vpop.xlane.xlu0 %367
        %v369 = vadd.f32 %v328, %v329
        %370 = vadd.xlane.f32.xlu0 %v369
        %v371 = vpop.xlane.xlu0 %370
        %v372 = vadd.f32 %v330, %v331
        %373 = vadd.xlane.f32.xlu0 %v372
        %v374 = vpop.xlane.xlu0 %373
        %v375 = vadd.f32 %v332, %v333
        %376 = vadd.xlane.f32.xlu0 %v375
        %v377 = vpop.xlane.xlu0 %376
        %v378 = vadd.f32 %v334, %v335
        %379 = vadd.xlane.f32.xlu0 %v378
        %v380 = vpop.xlane.xlu0 %379
        %v381 = vadd.f32 %v336, %v337
        %382 = vadd.xlane.f32.xlu0 %v381
        %v383 = vpop.xlane.xlu0 %382
        %v384 = vadd.f32 %v338, %v339
        %385 = vadd.xlane.f32.xlu0 %v384
        %v386 = vpop.xlane.xlu0 %385
        %v387 = vadd.f32 %v340, %v341
        %388 = vadd.xlane.f32.xlu0 %v387
        %v389 = vpop.xlane.xlu0 %388
        %v390 = vrcp.pop 256.0
        %v391 = vmul.f32 %v344, %v390
        %v392 = vmul.f32 %v347, %v390
        %v393 = vmul.f32 %v350, %v390
        %v394 = vmul.f32 %v353, %v390
        %v395 = vmul.f32 %v356, %v390
        %v396 = vmul.f32 %v359, %v390
        %v397 = vmul.f32 %v362, %v390
        %v398 = vmul.f32 %v365, %v390
        %v399 = vmul.f32 %v368, %v390
        %v400 = vmul.f32 %v371, %v390
        %v401 = vmul.f32 %v374, %v390
        %v402 = vmul.f32 %v377, %v390
        %v403 = vmul.f32 %v380, %v390
        %v404 = vmul.f32 %v383, %v390
        %v405 = vmul.f32 %v386, %v390
        %v406 = vmul.f32 %v389, %v390
        %v407 = vsub.f32 %v310, %v391
        %v408 = vsub.f32 %v311, %v391
        %v409 = vsub.f32 %v312, %v392
        %v410 = vsub.f32 %v313, %v392
        %v411 = vsub.f32 %v314, %v393
        %v412 = vsub.f32 %v315, %v393
        %v413 = vsub.f32 %v316, %v394
        %v414 = vsub.f32 %v317, %v394
        %v415 = vsub.f32 %v318, %v395
        %v416 = vsub.f32 %v319, %v395
        %v417 = vsub.f32 %v320, %v396
        %v418 = vsub.f32 %v321, %v396
        %v419 = vsub.f32 %v322, %v397
        %v420 = vsub.f32 %v323, %v397
        %v421 = vsub.f32 %v324, %v398
        %v422 = vsub.f32 %v325, %v398
        %v423 = vsub.f32 %v326, %v399
        %v424 = vsub.f32 %v327, %v399
        %v425 = vsub.f32 %v328, %v400
        %v426 = vsub.f32 %v329, %v400
        %v427 = vsub.f32 %v330, %v401
        %v428 = vsub.f32 %v331, %v401
        %v429 = vsub.f32 %v332, %v402
        %v430 = vsub.f32 %v333, %v402
        %v431 = vsub.f32 %v334, %v403
        %v432 = vsub.f32 %v335, %v403
        %v433 = vsub.f32 %v336, %v404
        %v434 = vsub.f32 %v337, %v404
        %v435 = vsub.f32 %v338, %v405
        %v436 = vsub.f32 %v339, %v405
        %v437 = vsub.f32 %v340, %v406
        %v438 = vsub.f32 %v341, %v406
        %v439 = vmul.f32 %v407, %v407
        %v440 = vmul.f32 %v408, %v408
        %v441 = vmul.f32 %v409, %v409
        %v442 = vmul.f32 %v410, %v410
        %v443 = vmul.f32 %v411, %v411
        %v444 = vmul.f32 %v412, %v412
        %v445 = vmul.f32 %v413, %v413
        %v446 = vmul.f32 %v414, %v414
        %v447 = vmul.f32 %v415, %v415
        %v448 = vmul.f32 %v416, %v416
        %v449 = vmul.f32 %v417, %v417
        %v450 = vmul.f32 %v418, %v418
        %v451 = vmul.f32 %v419, %v419
        %v452 = vmul.f32 %v420, %v420
        %v453 = vmul.f32 %v421, %v421
        %v454 = vmul.f32 %v422, %v422
        %v455 = vmul.f32 %v423, %v423
        %v456 = vmul.f32 %v424, %v424
        %v457 = vmul.f32 %v425, %v425
        %v458 = vmul.f32 %v426, %v426
        %v459 = vmul.f32 %v427, %v427
        %v460 = vmul.f32 %v428, %v428
        %v461 = vmul.f32 %v429, %v429
        %v462 = vmul.f32 %v430, %v430
        %v463 = vmul.f32 %v431, %v431
        %v464 = vmul.f32 %v432, %v432
        %v465 = vmul.f32 %v433, %v433
        %v466 = vmul.f32 %v434, %v434
        %v467 = vmul.f32 %v435, %v435
        %v468 = vmul.f32 %v436, %v436
        %v469 = vmul.f32 %v437, %v437
        %v470 = vmul.f32 %v438, %v438
        %v471 = vadd.f32 %v439, %v440
        %472 = vadd.xlane.f32.xlu0 %v471
        %v473 = vpop.xlane.xlu0 %472
        %v474 = vadd.f32 %v441, %v442
        %475 = vadd.xlane.f32.xlu0 %v474
        %v476 = vpop.xlane.xlu0 %475
        %v477 = vadd.f32 %v443, %v444
        %478 = vadd.xlane.f32.xlu0 %v477
        %v479 = vpop.xlane.xlu0 %478
        %v480 = vadd.f32 %v445, %v446
        %481 = vadd.xlane.f32.xlu0 %v480
        %v482 = vpop.xlane.xlu0 %481
        %v483 = vadd.f32 %v447, %v448
        %484 = vadd.xlane.f32.xlu0 %v483
        %v485 = vpop.xlane.xlu0 %484
        %v486 = vadd.f32 %v449, %v450
        %487 = vadd.xlane.f32.xlu0 %v486
        %v488 = vpop.xlane.xlu0 %487
        %v489 = vadd.f32 %v451, %v452
        %490 = vadd.xlane.f32.xlu0 %v489
        %v491 = vpop.xlane.xlu0 %490
        %v492 = vadd.f32 %v453, %v454
        %493 = vadd.xlane.f32.xlu0 %v492
        %v494 = vpop.xlane.xlu0 %493
        %v495 = vadd.f32 %v455, %v456
        %496 = vadd.xlane.f32.xlu0 %v495
        %v497 = vpop.xlane.xlu0 %496
        %v498 = vadd.f32 %v457, %v458
        %499 = vadd.xlane.f32.xlu0 %v498
        %v500 = vpop.xlane.xlu0 %499
        %v501 = vadd.f32 %v459, %v460
        %502 = vadd.xlane.f32.xlu0 %v501
        %v503 = vpop.xlane.xlu0 %502
        %v504 = vadd.f32 %v461, %v462
        %505 = vadd.xlane.f32.xlu0 %v504
        %v506 = vpop.xlane.xlu0 %505
        %v507 = vadd.f32 %v463, %v464
        %508 = vadd.xlane.f32.xlu0 %v507
        %v509 = vpop.xlane.xlu0 %508
        %v510 = vadd.f32 %v465, %v466
        %511 = vadd.xlane.f32.xlu0 %v510
        %v512 = vpop.xlane.xlu0 %511
        %v513 = vadd.f32 %v467, %v468
        %514 = vadd.xlane.f32.xlu0 %v513
        %v515 = vpop.xlane.xlu0 %514
        %v516 = vadd.f32 %v469, %v470
        %517 = vadd.xlane.f32.xlu0 %v516
        %v518 = vpop.xlane.xlu0 %517
        %v519 = vmul.f32 %v473, %v390
        %v520 = vmul.f32 %v476, %v390
        %v521 = vmul.f32 %v479, %v390
        %v522 = vmul.f32 %v482, %v390
        %v523 = vmul.f32 %v485, %v390
        %v524 = vmul.f32 %v488, %v390
        %v525 = vmul.f32 %v491, %v390
        %v526 = vmul.f32 %v494, %v390
        %v527 = vmul.f32 %v497, %v390
        %v528 = vmul.f32 %v500, %v390
        %v529 = vmul.f32 %v503, %v390
        %v530 = vmul.f32 %v506, %v390
        %v531 = vmul.f32 %v509, %v390
        %v532 = vmul.f32 %v512, %v390
        %v533 = vmul.f32 %v515, %v390
        %v534 = vmul.f32 %v518, %v390
        %v535 = vadd.f32 %v519, 0.001
        %v536 = vadd.f32 %v520, 0.001
        %v537 = vadd.f32 %v521, 0.001
        %v538 = vadd.f32 %v522, 0.001
        %v539 = vadd.f32 %v523, 0.001
        %v540 = vadd.f32 %v524, 0.001
        %v541 = vadd.f32 %v525, 0.001
        %v542 = vadd.f32 %v526, 0.001
        %v543 = vadd.f32 %v527, 0.001
        %v544 = vadd.f32 %v528, 0.001
        %v545 = vadd.f32 %v529, 0.001
        %v546 = vadd.f32 %v530, 0.001
        %v547 = vadd.f32 %v531, 0.001
        %v548 = vadd.f32 %v532, 0.001
        %v549 = vadd.f32 %v533, 0.001
        %v550 = vadd.f32 %v534, 0.001
        %v551 = vrsqrt.pop %v535
        %v552 = vrsqrt.pop %v536
        %v553 = vrsqrt.pop %v537
        %v554 = vrsqrt.pop %v538
        %v555 = vrsqrt.pop %v539
        %v556 = vrsqrt.pop %v540
        %v557 = vrsqrt.pop %v541
        %v558 = vrsqrt.pop %v542
        %v559 = vrsqrt.pop %v543
        %v560 = vrsqrt.pop %v544
        %v561 = vrsqrt.pop %v545
        %v562 = vrsqrt.pop %v546
        %v563 = vrsqrt.pop %v547
        %v564 = vrsqrt.pop %v548
        %v565 = vrsqrt.pop %v549
        %v566 = vrsqrt.pop %v550
        %v567 = vmul.f32 %v551, %v278
        %v568 = vmul.f32 %v552, %v279
        %v569 = vmul.f32 %v553, %v280
        %v570 = vmul.f32 %v554, %v281
        %v571 = vmul.f32 %v555, %v282
        %v572 = vmul.f32 %v556, %v283
        %v573 = vmul.f32 %v557, %v284
        %v574 = vmul.f32 %v558, %v285
        %v575 = vmul.f32 %v559, %v286
        %v576 = vmul.f32 %v560, %v287
        %v577 = vmul.f32 %v561, %v288
        %v578 = vmul.f32 %v562, %v289
        %v579 = vmul.f32 %v563, %v290
        %v580 = vmul.f32 %v564, %v291
        %v581 = vmul.f32 %v565, %v292
        %v582 = vmul.f32 %v566, %v293
        %584 = vset.pattern.permute.xlu0 0
        %585 = vperm.xlu0 %584, %v567
        %v586 = vpop.permute.xlu0 %585
        %589 = vset.pattern.permute.xlu0 0
        %590 = vperm.xlu0 %589, %v568
        %v591 = vpop.permute.xlu0 %590
        %594 = vset.pattern.permute.xlu0 0
        %595 = vperm.xlu0 %594, %v569
        %v596 = vpop.permute.xlu0 %595
        %599 = vset.pattern.permute.xlu0 0
        %600 = vperm.xlu0 %599, %v570
        %v601 = vpop.permute.xlu0 %600
        %604 = vset.pattern.permute.xlu0 0
        %605 = vperm.xlu0 %604, %v571
        %v606 = vpop.permute.xlu0 %605
        %609 = vset.pattern.permute.xlu0 0
        %610 = vperm.xlu0 %609, %v572
        %v611 = vpop.permute.xlu0 %610
        %614 = vset.pattern.permute.xlu0 0
        %615 = vperm.xlu0 %614, %v573
        %v616 = vpop.permute.xlu0 %615
        %619 = vset.pattern.permute.xlu0 0
        %620 = vperm.xlu0 %619, %v574
        %v621 = vpop.permute.xlu0 %620
        %624 = vset.pattern.permute.xlu0 0
        %625 = vperm.xlu0 %624, %v575
        %v626 = vpop.permute.xlu0 %625
        %629 = vset.pattern.permute.xlu0 0
        %630 = vperm.xlu0 %629, %v576
        %v631 = vpop.permute.xlu0 %630
        %634 = vset.pattern.permute.xlu0 0
        %635 = vperm.xlu0 %634, %v577
        %v636 = vpop.permute.xlu0 %635
        %639 = vset.pattern.permute.xlu0 0
        %640 = vperm.xlu0 %639, %v578
        %v641 = vpop.permute.xlu0 %640
        %644 = vset.pattern.permute.xlu0 0
        %645 = vperm.xlu0 %644, %v579
        %v646 = vpop.permute.xlu0 %645
        %649 = vset.pattern.permute.xlu0 0
        %650 = vperm.xlu0 %649, %v580
        %v651 = vpop.permute.xlu0 %650
        %654 = vset.pattern.permute.xlu0 0
        %655 = vperm.xlu0 %654, %v581
        %v656 = vpop.permute.xlu0 %655
        %659 = vset.pattern.permute.xlu0 0
        %660 = vperm.xlu0 %659, %v582
        %v661 = vpop.permute.xlu0 %660
        %v663 = vmul.f32 %v407, %v586
        %v664 = vmul.f32 %v408, %v586
        %v665 = vmul.f32 %v409, %v591
        %v666 = vmul.f32 %v410, %v591
        %v667 = vmul.f32 %v411, %v596
        %v668 = vmul.f32 %v412, %v596
        %v669 = vmul.f32 %v413, %v601
        %v670 = vmul.f32 %v414, %v601
        %v671 = vmul.f32 %v415, %v606
        %v672 = vmul.f32 %v416, %v606
        %v673 = vmul.f32 %v417, %v611
        %v674 = vmul.f32 %v418, %v611
        %v675 = vmul.f32 %v419, %v616
        %v676 = vmul.f32 %v420, %v616
        %v677 = vmul.f32 %v421, %v621
        %v678 = vmul.f32 %v422, %v621
        %v679 = vmul.f32 %v423, %v626
        %v680 = vmul.f32 %v424, %v626
        %v681 = vmul.f32 %v425, %v631
        %v682 = vmul.f32 %v426, %v631
        %v683 = vmul.f32 %v427, %v636
        %v684 = vmul.f32 %v428, %v636
        %v685 = vmul.f32 %v429, %v641
        %v686 = vmul.f32 %v430, %v641
        %v687 = vmul.f32 %v431, %v646
        %v688 = vmul.f32 %v432, %v646
        %v689 = vmul.f32 %v433, %v651
        %v690 = vmul.f32 %v434, %v651
        %v691 = vmul.f32 %v435, %v656
        %v692 = vmul.f32 %v436, %v656
        %v693 = vmul.f32 %v437, %v661
        %v694 = vmul.f32 %v438, %v661
        %696 = vset.pattern.permute.xlu0 0
        %697 = vperm.xlu0 %696, %v294
        %v698 = vpop.permute.xlu0 %697
        %701 = vset.pattern.permute.xlu0 0
        %702 = vperm.xlu0 %701, %v295
        %v703 = vpop.permute.xlu0 %702
        %706 = vset.pattern.permute.xlu0 0
        %707 = vperm.xlu0 %706, %v296
        %v708 = vpop.permute.xlu0 %707
        %711 = vset.pattern.permute.xlu0 0
        %712 = vperm.xlu0 %711, %v297
        %v713 = vpop.permute.xlu0 %712
        %716 = vset.pattern.permute.xlu0 0
        %717 = vperm.xlu0 %716, %v298
        %v718 = vpop.permute.xlu0 %717
        %721 = vset.pattern.permute.xlu0 0
        %722 = vperm.xlu0 %721, %v299
        %v723 = vpop.permute.xlu0 %722
        %726 = vset.pattern.permute.xlu0 0
        %727 = vperm.xlu0 %726, %v300
        %v728 = vpop.permute.xlu0 %727
        %731 = vset.pattern.permute.xlu0 0
        %732 = vperm.xlu0 %731, %v301
        %v733 = vpop.permute.xlu0 %732
        %736 = vset.pattern.permute.xlu0 0
        %737 = vperm.xlu0 %736, %v302
        %v738 = vpop.permute.xlu0 %737
        %741 = vset.pattern.permute.xlu0 0
        %742 = vperm.xlu0 %741, %v303
        %v743 = vpop.permute.xlu0 %742
        %746 = vset.pattern.permute.xlu0 0
        %747 = vperm.xlu0 %746, %v304
        %v748 = vpop.permute.xlu0 %747
        %751 = vset.pattern.permute.xlu0 0
        %752 = vperm.xlu0 %751, %v305
        %v753 = vpop.permute.xlu0 %752
        %756 = vset.pattern.permute.xlu0 0
        %757 = vperm.xlu0 %756, %v306
        %v758 = vpop.permute.xlu0 %757
        %761 = vset.pattern.permute.xlu0 0
        %762 = vperm.xlu0 %761, %v307
        %v763 = vpop.permute.xlu0 %762
        %766 = vset.pattern.permute.xlu0 0
        %767 = vperm.xlu0 %766, %v308
        %v768 = vpop.permute.xlu0 %767
        %771 = vset.pattern.permute.xlu0 0
        %772 = vperm.xlu0 %771, %v309
        %v773 = vpop.permute.xlu0 %772
        %v775 = vadd.f32 %v663, %v698
        %v776 = vadd.f32 %v664, %v698
        %v777 = vadd.f32 %v665, %v703
        %v778 = vadd.f32 %v666, %v703
        %v779 = vadd.f32 %v667, %v708
        %v780 = vadd.f32 %v668, %v708
        %v781 = vadd.f32 %v669, %v713
        %v782 = vadd.f32 %v670, %v713
        %v783 = vadd.f32 %v671, %v718
        %v784 = vadd.f32 %v672, %v718
        %v785 = vadd.f32 %v673, %v723
        %v786 = vadd.f32 %v674, %v723
        %v787 = vadd.f32 %v675, %v728
        %v788 = vadd.f32 %v676, %v728
        %v789 = vadd.f32 %v677, %v733
        %v790 = vadd.f32 %v678, %v733
        %v791 = vadd.f32 %v679, %v738
        %v792 = vadd.f32 %v680, %v738
        %v793 = vadd.f32 %v681, %v743
        %v794 = vadd.f32 %v682, %v743
        %v795 = vadd.f32 %v683, %v748
        %v796 = vadd.f32 %v684, %v748
        %v797 = vadd.f32 %v685, %v753
        %v798 = vadd.f32 %v686, %v753
        %v799 = vadd.f32 %v687, %v758
        %v800 = vadd.f32 %v688, %v758
        %v801 = vadd.f32 %v689, %v763
        %v802 = vadd.f32 %v690, %v763
        %v803 = vadd.f32 %v691, %v768
        %v804 = vadd.f32 %v692, %v768
        %v805 = vadd.f32 %v693, %v773
        %v806 = vadd.f32 %v694, %v773
        %v807 = vmax.f32 %v775, 0.0
        %v808 = vmax.f32 %v776, 0.0
        %v809 = vmax.f32 %v777, 0.0
        %v810 = vmax.f32 %v778, 0.0
        %v811 = vmax.f32 %v779, 0.0
        %v812 = vmax.f32 %v780, 0.0
        %v813 = vmax.f32 %v781, 0.0
        %v814 = vmax.f32 %v782, 0.0
        %v815 = vmax.f32 %v783, 0.0
        %v816 = vmax.f32 %v784, 0.0
        %v817 = vmax.f32 %v785, 0.0
        %v818 = vmax.f32 %v786, 0.0
        %v819 = vmax.f32 %v787, 0.0
        %v820 = vmax.f32 %v788, 0.0
        %v821 = vmax.f32 %v789, 0.0
        %v822 = vmax.f32 %v790, 0.0
        %v823 = vmax.f32 %v791, 0.0
        %v824 = vmax.f32 %v792, 0.0
        %v825 = vmax.f32 %v793, 0.0
        %v826 = vmax.f32 %v794, 0.0
        %v827 = vmax.f32 %v795, 0.0
        %v828 = vmax.f32 %v796, 0.0
        %v829 = vmax.f32 %v797, 0.0
        %v830 = vmax.f32 %v798, 0.0
        %v831 = vmax.f32 %v799, 0.0
        %v832 = vmax.f32 %v800, 0.0
        %v833 = vmax.f32 %v801, 0.0
        %v834 = vmax.f32 %v802, 0.0
        %v835 = vmax.f32 %v803, 0.0
        %v836 = vmax.f32 %v804, 0.0
        %v837 = vmax.f32 %v805, 0.0
        %v838 = vmax.f32 %v806, 0.0
        %840 = vset.pattern.permute.xlu0 0
        %841 = vperm.xlu0 %840, %v262
        %v842 = vpop.permute.xlu0 %841
        %845 = vset.pattern.permute.xlu0 0
        %846 = vperm.xlu0 %845, %v263
        %v847 = vpop.permute.xlu0 %846
        %850 = vset.pattern.permute.xlu0 0
        %851 = vperm.xlu0 %850, %v264
        %v852 = vpop.permute.xlu0 %851
        %855 = vset.pattern.permute.xlu0 0
        %856 = vperm.xlu0 %855, %v265
        %v857 = vpop.permute.xlu0 %856
        %860 = vset.pattern.permute.xlu0 0
        %861 = vperm.xlu0 %860, %v266
        %v862 = vpop.permute.xlu0 %861
        %865 = vset.pattern.permute.xlu0 0
        %866 = vperm.xlu0 %865, %v267
        %v867 = vpop.permute.xlu0 %866
        %870 = vset.pattern.permute.xlu0 0
        %871 = vperm.xlu0 %870, %v268
        %v872 = vpop.permute.xlu0 %871
        %875 = vset.pattern.permute.xlu0 0
        %876 = vperm.xlu0 %875, %v269
        %v877 = vpop.permute.xlu0 %876
        %880 = vset.pattern.permute.xlu0 0
        %881 = vperm.xlu0 %880, %v270
        %v882 = vpop.permute.xlu0 %881
        %885 = vset.pattern.permute.xlu0 0
        %886 = vperm.xlu0 %885, %v271
        %v887 = vpop.permute.xlu0 %886
        %890 = vset.pattern.permute.xlu0 0
        %891 = vperm.xlu0 %890, %v272
        %v892 = vpop.permute.xlu0 %891
        %895 = vset.pattern.permute.xlu0 0
        %896 = vperm.xlu0 %895, %v273
        %v897 = vpop.permute.xlu0 %896
        %900 = vset.pattern.permute.xlu0 0
        %901 = vperm.xlu0 %900, %v274
        %v902 = vpop.permute.xlu0 %901
        %905 = vset.pattern.permute.xlu0 0
        %906 = vperm.xlu0 %905, %v275
        %v907 = vpop.permute.xlu0 %906
        %910 = vset.pattern.permute.xlu0 0
        %911 = vperm.xlu0 %910, %v276
        %v912 = vpop.permute.xlu0 %911
        %915 = vset.pattern.permute.xlu0 0
        %916 = vperm.xlu0 %915, %v277
        %v917 = vpop.permute.xlu0 %916
        %919 = vmatprep.subr.mxu0 %v808
        %920 = vmatpush1.msra.mxu0 %v807
        %921 = vmatprep.subr.mxu0 %v810
        %922 = vmatpush1.msra.mxu0 %v809
        %923 = vmatprep.subr.mxu0 %v812
        %924 = vmatpush1.msra.mxu0 %v811
        %925 = vmatprep.subr.mxu0 %v814
        %926 = vmatpush1.msra.mxu0 %v813
        %927 = vmatprep.subr.mxu0 %v816
        %928 = vmatpush1.msra.mxu0 %v815
        %929 = vmatprep.subr.mxu0 %v818
        %930 = vmatpush1.msra.mxu0 %v817
        %931 = vmatprep.subr.mxu0 %v820
        %932 = vmatpush1.msra.mxu0 %v819
        %933 = vmatprep.subr.mxu0 %v822
        %934 = vmatpush1.msra.mxu0 %v821
        %935 = vmatprep.subr.mxu0 %v824
        %936 = vmatpush1.msra.mxu0 %v823
        %937 = vmatprep.subr.mxu0 %v826
        %938 = vmatpush1.msra.mxu0 %v825
        %939 = vmatprep.subr.mxu0 %v828
        %940 = vmatpush1.msra.mxu0 %v827
        %941 = vmatprep.subr.mxu0 %v830
        %942 = vmatpush1.msra.mxu0 %v829
        %943 = vmatprep.subr.mxu0 %v832
        %944 = vmatpush1.msra.mxu0 %v831
        %945 = vmatprep.subr.mxu0 %v834
        %946 = vmatpush1.msra.mxu0 %v833
        %947 = vmatprep.subr.mxu0 %v836
        %948 = vmatpush1.msra.mxu0 %v835
        %949 = vmatprep.subr.mxu0 %v838
        %950 = vmatpush1.msra.mxu0 %v837
        %951 = vmatprep.subr.mxu0 0.0
        %952 = vmatpush1.msra.mxu0 0.0
        %953 = vmatprep.subr.mxu0 0.0
        %954 = vmatpush1.msra.mxu0 0.0
        %955 = vmatprep.subr.mxu0 0.0
        %956 = vmatpush1.msra.mxu0 0.0
        %957 = vmatprep.subr.mxu0 0.0
        %958 = vmatpush1.msra.mxu0 0.0
        %959 = vmatprep.subr.mxu0 0.0
        %960 = vmatpush1.msra.mxu0 0.0
        %961 = vmatprep.subr.mxu0 0.0
        %962 = vmatpush1.msra.mxu0 0.0
        %963 = vmatprep.subr.mxu0 0.0
        %964 = vmatpush1.msra.mxu0 0.0
        %965 = vmatprep.subr.mxu0 0.0
        %966 = vmatpush1.msra.mxu0 0.0
        %967 = vmatprep.subr.mxu0 0.0
        %968 = vmatpush1.msra.mxu0 0.0
        %969 = vmatprep.subr.mxu0 0.0
        %970 = vmatpush1.msra.mxu0 0.0
        %971 = vmatprep.subr.mxu0 0.0
        %972 = vmatpush1.msra.mxu0 0.0
        %973 = vmatprep.subr.mxu0 0.0
        %974 = vmatpush1.msra.mxu0 0.0
        %975 = vmatprep.subr.mxu0 0.0
        %976 = vmatpush1.msra.mxu0 0.0
        %977 = vmatprep.subr.mxu0 0.0
        %978 = vmatpush1.msra.mxu0 0.0
        %979 = vmatprep.subr.mxu0 0.0
        %980 = vmatpush1.msra.mxu0 0.0
        %981 = vmatprep.subr.mxu0 0.0
        %982 = vmatpush1.msra.mxu0 0.0
        %983 = vmatprep.mubr.f32.mxu0 0.0
        %984 = vmatmul.mubr.f32.gmra.mrb[0].mxu0 %v246
        %v985 = vpop.f32.mrb[0].mxu0
        %v986 = vadd.f32 %v842, %v985
        %v987 = vpop.f32.mrb[0].mxu0
        %v988 = vadd.f32 %v842, %v987
        %989 = vmatprep.mubr.f32.mxu0 0.0
        %990 = vmatmul.mubr.f32.gmra.mrb[0].mxu0 %v247
        %v991 = vpop.f32.mrb[0].mxu0
        %v992 = vadd.f32 %v847, %v991
        %v993 = vpop.f32.mrb[0].mxu0
        %v994 = vadd.f32 %v847, %v993
        %995 = vmatprep.mubr.f32.mxu0 0.0
        %996 = vmatmul.mubr.f32.gmra.mrb[0].mxu0 %v248
        %v997 = vpop.f32.mrb[0].mxu0
        %v998 = vadd.f32 %v852, %v997
        %v999 = vpop.f32.mrb[0].mxu0
        %v1000 = vadd.f32 %v852, %v999
        %1001 = vmatprep.mubr.f32.mxu0 0.0
        %1002 = vmatmul.mubr.f32.gmra.mrb[0].mxu0 %v249
        %v1003 = vpop.f32.mrb[0].mxu0
        %v1004 = vadd.f32 %v857, %v1003
        %v1005 = vpop.f32.mrb[0].mxu0
        %v1006 = vadd.f32 %v857, %v1005
        %1007 = vmatprep.mubr.f32.mxu0 0.0
        %1008 = vmatmul.mubr.f32.gmra.mrb[0].mxu0 %v250
        %v1009 = vpop.f32.mrb[0].mxu0
        %v1010 = vadd.f32 %v862, %v1009
        %v1011 = vpop.f32.mrb[0].mxu0
        %v1012 = vadd.f32 %v862, %v1011
        %1013 = vmatprep.mubr.f32.mxu0 0.0
        %1014 = vmatmul.mubr.f32.gmra.mrb[0].mxu0 %v251
        %v1015 = vpop.f32.mrb[0].mxu0
        %v1016 = vadd.f32 %v867, %v1015
        %v1017 = vpop.f32.mrb[0].mxu0
        %v1018 = vadd.f32 %v867, %v1017
        %1019 = vmatprep.mubr.f32.mxu0 0.0
        %1020 = vmatmul.mubr.f32.gmra.mrb[0].mxu0 %v252
        %v1021 = vpop.f32.mrb[0].mxu0
        %v1022 = vadd.f32 %v872, %v1021
        %v1023 = vpop.f32.mrb[0].mxu0
        %v1024 = vadd.f32 %v872, %v1023
        %1025 = vmatprep.mubr.f32.mxu0 0.0
        %1026 = vmatmul.mubr.f32.gmra.mrb[0].mxu0 %v253
        %v1027 = vpop.f32.mrb[0].mxu0
        %v1028 = vadd.f32 %v877, %v1027
        %v1029 = vpop.f32.mrb[0].mxu0
        %v1030 = vadd.f32 %v877, %v1029
        %1031 = vmatprep.mubr.f32.mxu0 0.0
        %1032 = vmatmul.mubr.f32.gmra.mrb[0].mxu0 %v254
        %v1033 = vpop.f32.mrb[0].mxu0
        %v1034 = vadd.f32 %v882, %v1033
        %v1035 = vpop.f32.mrb[0].mxu0
        %v1036 = vadd.f32 %v882, %v1035
        %1037 = vmatprep.mubr.f32.mxu0 0.0
        %1038 = vmatmul.mubr.f32.gmra.mrb[0].mxu0 %v255
        %v1039 = vpop.f32.mrb[0].mxu0
        %v1040 = vadd.f32 %v887, %v1039
        %v1041 = vpop.f32.mrb[0].mxu0
        %v1042 = vadd.f32 %v887, %v1041
        %1043 = vmatprep.mubr.f32.mxu0 0.0
        %1044 = vmatmul.mubr.f32.gmra.mrb[0].mxu0 %v256
        %v1045 = vpop.f32.mrb[0].mxu0
        %v1046 = vadd.f32 %v892, %v1045
        %v1047 = vpop.f32.mrb[0].mxu0
        %v1048 = vadd.f32 %v892, %v1047
        %1049 = vmatprep.mubr.f32.mxu0 0.0
        %1050 = vmatmul.mubr.f32.gmra.mrb[0].mxu0 %v257
        %v1051 = vpop.f32.mrb[0].mxu0
        %v1052 = vadd.f32 %v897, %v1051
        %v1053 = vpop.f32.mrb[0].mxu0
        %v1054 = vadd.f32 %v897, %v1053
        %1055 = vmatprep.mubr.f32.mxu0 0.0
        %1056 = vmatmul.mubr.f32.gmra.mrb[0].mxu0 %v258
        %v1057 = vpop.f32.mrb[0].mxu0
        %v1058 = vadd.f32 %v902, %v1057
        %v1059 = vpop.f32.mrb[0].mxu0
        %v1060 = vadd.f32 %v902, %v1059
        %1061 = vmatprep.mubr.f32.mxu0 0.0
        %1062 = vmatmul.mubr.f32.gmra.mrb[0].mxu0 %v259
        %v1063 = vpop.f32.mrb[0].mxu0
        %v1064 = vadd.f32 %v907, %v1063
        %v1065 = vpop.f32.mrb[0].mxu0
        %v1066 = vadd.f32 %v907, %v1065
        %1067 = vmatprep.mubr.f32.mxu0 0.0
        %1068 = vmatmul.mubr.f32.gmra.mrb[0].mxu0 %v260
        %v1069 = vpop.f32.mrb[0].mxu0
        %v1070 = vadd.f32 %v912, %v1069
        %v1071 = vpop.f32.mrb[0].mxu0
        %v1072 = vadd.f32 %v912, %v1071
        %1073 = vmatprep.mubr.f32.mxu0 0.0
        %1074 = vmatmul.mubr.f32.gmra.mrb[0].mxu0 %v261
        %v1075 = vpop.f32.mrb[0].mxu0
        %v1076 = vadd.f32 %v917, %v1075
        %v1077 = vpop.f32.mrb[0].mxu0
        %v1078 = vadd.f32 %v917, %v1077
        %1079 = vdwg.mxu0
        %v1080 = vmax.f32 %v986, %v988
        %1081 = vmax.xlane.f32.xlu0 %v1080
        %v1082 = vpop.xlane.xlu0 %1081
        %v1083 = vmax.f32 %v992, %v994
        %1084 = vmax.xlane.f32.xlu0 %v1083
        %v1085 = vpop.xlane.xlu0 %1084
        %v1086 = vmax.f32 %v998, %v1000
        %1087 = vmax.xlane.f32.xlu0 %v1086
        %v1088 = vpop.xlane.xlu0 %1087
        %v1089 = vmax.f32 %v1004, %v1006
        %1090 = vmax.xlane.f32.xlu0 %v1089
        %v1091 = vpop.xlane.xlu0 %1090
        %v1092 = vmax.f32 %v1010, %v1012
        %1093 = vmax.xlane.f32.xlu0 %v1092
        %v1094 = vpop.xlane.xlu0 %1093
        %v1095 = vmax.f32 %v1016, %v1018
        %1096 = vmax.xlane.f32.xlu0 %v1095
        %v1097 = vpop.xlane.xlu0 %1096
        %v1098 = vmax.f32 %v1022, %v1024
        %1099 = vmax.xlane.f32.xlu0 %v1098
        %v1100 = vpop.xlane.xlu0 %1099
        %v1101 = vmax.f32 %v1028, %v1030
        %1102 = vmax.xlane.f32.xlu0 %v1101
        %v1103 = vpop.xlane.xlu0 %1102
        %v1104 = vmax.f32 %v1034, %v1036
        %1105 = vmax.xlane.f32.xlu0 %v1104
        %v1106 = vpop.xlane.xlu0 %1105
        %v1107 = vmax.f32 %v1040, %v1042
        %1108 = vmax.xlane.f32.xlu0 %v1107
        %v1109 = vpop.xlane.xlu0 %1108
        %v1110 = vmax.f32 %v1046, %v1048
        %1111 = vmax.xlane.f32.xlu0 %v1110
        %v1112 = vpop.xlane.xlu0 %1111
        %v1113 = vmax.f32 %v1052, %v1054
        %1114 = vmax.xlane.f32.xlu0 %v1113
        %v1115 = vpop.xlane.xlu0 %1114
        %v1116 = vmax.f32 %v1058, %v1060
        %1117 = vmax.xlane.f32.xlu0 %v1116
        %v1118 = vpop.xlane.xlu0 %1117
        %v1119 = vmax.f32 %v1064, %v1066
        %1120 = vmax.xlane.f32.xlu0 %v1119
        %v1121 = vpop.xlane.xlu0 %1120
        %v1122 = vmax.f32 %v1070, %v1072
        %1123 = vmax.xlane.f32.xlu0 %v1122
        %v1124 = vpop.xlane.xlu0 %1123
        %v1125 = vmax.f32 %v1076, %v1078
        %1126 = vmax.xlane.f32.xlu0 %v1125
        %v1127 = vpop.xlane.xlu0 %1126
        %v1128 = vsub.f32 %v986, %v1082
        %v1129 = vsub.f32 %v988, %v1082
        %v1130 = vsub.f32 %v992, %v1085
        %v1131 = vsub.f32 %v994, %v1085
        %v1132 = vsub.f32 %v998, %v1088
        %v1133 = vsub.f32 %v1000, %v1088
        %v1134 = vsub.f32 %v1004, %v1091
        %v1135 = vsub.f32 %v1006, %v1091
        %v1136 = vsub.f32 %v1010, %v1094
        %v1137 = vsub.f32 %v1012, %v1094
        %v1138 = vsub.f32 %v1016, %v1097
        %v1139 = vsub.f32 %v1018, %v1097
        %v1140 = vsub.f32 %v1022, %v1100
        %v1141 = vsub.f32 %v1024, %v1100
        %v1142 = vsub.f32 %v1028, %v1103
        %v1143 = vsub.f32 %v1030, %v1103
        %v1144 = vsub.f32 %v1034, %v1106
        %v1145 = vsub.f32 %v1036, %v1106
        %v1146 = vsub.f32 %v1040, %v1109
        %v1147 = vsub.f32 %v1042, %v1109
        %v1148 = vsub.f32 %v1046, %v1112
        %v1149 = vsub.f32 %v1048, %v1112
        %v1150 = vsub.f32 %v1052, %v1115
        %v1151 = vsub.f32 %v1054, %v1115
        %v1152 = vsub.f32 %v1058, %v1118
        %v1153 = vsub.f32 %v1060, %v1118
        %v1154 = vsub.f32 %v1064, %v1121
        %v1155 = vsub.f32 %v1066, %v1121
        %v1156 = vsub.f32 %v1070, %v1124
        %v1157 = vsub.f32 %v1072, %v1124
        %v1158 = vsub.f32 %v1076, %v1127
        %v1159 = vsub.f32 %v1078, %v1127
        %v1160 = vmul.f32 %v1128, 1.442695
        %v1161 = vpow.pop %v1160
        %v1162 = vmul.f32 %v1129, 1.442695
        %v1163 = vpow.pop %v1162
        %v1164 = vmul.f32 %v1130, 1.442695
        %v1165 = vpow.pop %v1164
        %v1166 = vmul.f32 %v1131, 1.442695
        %v1167 = vpow.pop %v1166
        %v1168 = vmul.f32 %v1132, 1.442695
        %v1169 = vpow.pop %v1168
        %v1170 = vmul.f32 %v1133, 1.442695
        %v1171 = vpow.pop %v1170
        %v1172 = vmul.f32 %v1134, 1.442695
        %v1173 = vpow.pop %v1172
        %v1174 = vmul.f32 %v1135, 1.442695
        %v1175 = vpow.pop %v1174
        %v1176 = vmul.f32 %v1136, 1.442695
        %v1177 = vpow.pop %v1176
        %v1178 = vmul.f32 %v1137, 1.442695
        %v1179 = vpow.pop %v1178
        %v1180 = vmul.f32 %v1138, 1.442695
        %v1181 = vpow.pop %v1180
        %v1182 = vmul.f32 %v1139, 1.442695
        %v1183 = vpow.pop %v1182
        %v1184 = vmul.f32 %v1140, 1.442695
        %v1185 = vpow.pop %v1184
        %v1186 = vmul.f32 %v1141, 1.442695
        %v1187 = vpow.pop %v1186
        %v1188 = vmul.f32 %v1142, 1.442695
        %v1189 = vpow.pop %v1188
        %v1190 = vmul.f32 %v1143, 1.442695
        %v1191 = vpow.pop %v1190
        %v1192 = vmul.f32 %v1144, 1.442695
        %v1193 = vpow.pop %v1192
        %v1194 = vmul.f32 %v1145, 1.442695
        %v1195 = vpow.pop %v1194
        %v1196 = vmul.f32 %v1146, 1.442695
        %v1197 = vpow.pop %v1196
        %v1198 = vmul.f32 %v1147, 1.442695
        %v1199 = vpow.pop %v1198
        %v1200 = vmul.f32 %v1148, 1.442695
        %v1201 = vpow.pop %v1200
        %v1202 = vmul.f32 %v1149, 1.442695
        %v1203 = vpow.pop %v1202
        %v1204 = vmul.f32 %v1150, 1.442695
        %v1205 = vpow.pop %v1204
        %v1206 = vmul.f32 %v1151, 1.442695
        %v1207 = vpow.pop %v1206
        %v1208 = vmul.f32 %v1152, 1.442695
        %v1209 = vpow.pop %v1208
        %v1210 = vmul.f32 %v1153, 1.442695
        %v1211 = vpow.pop %v1210
        %v1212 = vmul.f32 %v1154, 1.442695
        %v1213 = vpow.pop %v1212
        %v1214 = vmul.f32 %v1155, 1.442695
        %v1215 = vpow.pop %v1214
        %v1216 = vmul.f32 %v1156, 1.442695
        %v1217 = vpow.pop %v1216
        %v1218 = vmul.f32 %v1157, 1.442695
        %v1219 = vpow.pop %v1218
        %v1220 = vmul.f32 %v1158, 1.442695
        %v1221 = vpow.pop %v1220
        %v1222 = vmul.f32 %v1159, 1.442695
        %v1223 = vpow.pop %v1222
        %1224 = vmatprep.subr.mxu0 %v1163
        %1225 = vmatpush1.xpose.msra.mxu0 %v1161
        %1226 = vmatprep.subr.mxu0 %v1167
        %1227 = vmatpush1.xpose.msra.mxu0 %v1165
        %1228 = vmatprep.subr.mxu0 %v1171
        %1229 = vmatpush1.xpose.msra.mxu0 %v1169
        %1230 = vmatprep.subr.mxu0 %v1175
        %1231 = vmatpush1.xpose.msra.mxu0 %v1173
        %1232 = vmatprep.subr.mxu0 %v1179
        %1233 = vmatpush1.xpose.msra.mxu0 %v1177
        %1234 = vmatprep.subr.mxu0 %v1183
        %1235 = vmatpush1.xpose.msra.mxu0 %v1181
        %1236 = vmatprep.subr.mxu0 %v1187
        %1237 = vmatpush1.xpose.msra.mxu0 %v1185
        %1238 = vmatprep.subr.mxu0 %v1191
        %1239 = vmatpush1.xpose.msra.mxu0 %v1189
        %1240 = vmatprep.subr.mxu0 %v1195
        %1241 = vmatpush1.xpose.msra.mxu0 %v1193
        %1242 = vmatprep.subr.mxu0 %v1199
        %1243 = vmatpush1.xpose.msra.mxu0 %v1197
        %1244 = vmatprep.subr.mxu0 %v1203
        %1245 = vmatpush1.xpose.msra.mxu0 %v1201
        %1246 = vmatprep.subr.mxu0 %v1207
        %1247 = vmatpush1.xpose.msra.mxu0 %v1205
        %1248 = vmatprep.subr.mxu0 %v1211
        %1249 = vmatpush1.xpose.msra.mxu0 %v1209
        %1250 = vmatprep.subr.mxu0 %v1215
        %1251 = vmatpush1.xpose.msra.mxu0 %v1213
        %1252 = vmatprep.subr.mxu0 %v1219
        %1253 = vmatpush1.xpose.msra.mxu0 %v1217
        %1254 = vmatprep.subr.mxu0 %v1223
        %1255 = vmatpush1.xpose.msra.mxu0 %v1221
        %1256 = vmatprep.subr.mxu0 0.0
        %1257 = vmatpush1.xpose.msra.mxu0 0.0
        %1258 = vmatprep.subr.mxu0 0.0
        %1259 = vmatpush1.xpose.msra.mxu0 0.0
        %1260 = vmatprep.subr.mxu0 0.0
        %1261 = vmatpush1.xpose.msra.mxu0 0.0
        %1262 = vmatprep.subr.mxu0 0.0
        %1263 = vmatpush1.xpose.msra.mxu0 0.0
        %1264 = vmatprep.subr.mxu0 0.0
        %1265 = vmatpush1.xpose.msra.mxu0 0.0
        %1266 = vmatprep.subr.mxu0 0.0
        %1267 = vmatpush1.xpose.msra.mxu0 0.0
        %1268 = vmatprep.subr.mxu0 0.0
        %1269 = vmatpush1.xpose.msra.mxu0 0.0
        %1270 = vmatprep.subr.mxu0 0.0
        %1271 = vmatpush1.xpose.msra.mxu0 0.0
        %1272 = vmatprep.subr.mxu0 0.0
        %1273 = vmatpush1.xpose.msra.mxu0 0.0
        %1274 = vmatprep.subr.mxu0 0.0
        %1275 = vmatpush1.xpose.msra.mxu0 0.0
        %1276 = vmatprep.subr.mxu0 0.0
        %1277 = vmatpush1.xpose.msra.mxu0 0.0
        %1278 = vmatprep.subr.mxu0 0.0
        %1279 = vmatpush1.xpose.msra.mxu0 0.0
        %1280 = vmatprep.subr.mxu0 0.0
        %1281 = vmatpush1.xpose.msra.mxu0 0.0
        %1282 = vmatprep.subr.mxu0 0.0
        %1283 = vmatpush1.xpose.msra.mxu0 0.0
        %1284 = vmatprep.subr.mxu0 0.0
        %1285 = vmatpush1.xpose.msra.mxu0 0.0
        %1286 = vmatprep.subr.mxu0 0.0
        %1287 = vmatpush1.xpose.msra.mxu0 0.0
        %1288 = vmatprep.mubr.f32.mxu0 %v311
        %1289 = vmatmul.mubr.f32.gmra.mrb[0].mxu0 %v310
        %v1290 = vpop.f32.mrb[0].mxu0
        %v1291 = vadd.f32 0.0, %v1290
        %v1292 = vpop.f32.mrb[0].mxu0
        %1293 = vmatprep.mubr.f32.mxu0 %v313
        %1294 = vmatmul.mubr.f32.gmra.mrb[0].mxu0 %v312
        %v1295 = vpop.f32.mrb[0].mxu0
        %v1296 = vadd.f32 0.0, %v1295
        %v1297 = vpop.f32.mrb[0].mxu0
        %1298 = vmatprep.mubr.f32.mxu0 %v315
        %1299 = vmatmul.mubr.f32.gmra.mrb[0].mxu0 %v314
        %v1300 = vpop.f32.mrb[0].mxu0
        %v1301 = vadd.f32 0.0, %v1300
        %v1302 = vpop.f32.mrb[0].mxu0
        %1303 = vmatprep.mubr.f32.mxu0 %v317
        %1304 = vmatmul.mubr.f32.gmra.mrb[0].mxu0 %v316
        %v1305 = vpop.f32.mrb[0].mxu0
        %v1306 = vadd.f32 0.0, %v1305
        %v1307 = vpop.f32.mrb[0].mxu0
        %1308 = vmatprep.mubr.f32.mxu0 %v319
        %1309 = vmatmul.mubr.f32.gmra.mrb[0].mxu0 %v318
        %v1310 = vpop.f32.mrb[0].mxu0
        %v1311 = vadd.f32 0.0, %v1310
        %v1312 = vpop.f32.mrb[0].mxu0
        %1313 = vmatprep.mubr.f32.mxu0 %v321
        %1314 = vmatmul.mubr.f32.gmra.mrb[0].mxu0 %v320
        %v1315 = vpop.f32.mrb[0].mxu0
        %v1316 = vadd.f32 0.0, %v1315
        %v1317 = vpop.f32.mrb[0].mxu0
        %1318 = vmatprep.mubr.f32.mxu0 %v323
        %1319 = vmatmul.mubr.f32.gmra.mrb[0].mxu0 %v322
        %v1320 = vpop.f32.mrb[0].mxu0
        %v1321 = vadd.f32 0.0, %v1320
        %v1322 = vpop.f32.mrb[0].mxu0
        %1323 = vmatprep.mubr.f32.mxu0 %v325
        %1324 = vmatmul.mubr.f32.gmra.mrb[0].mxu0 %v324
        %v1325 = vpop.f32.mrb[0].mxu0
        %v1326 = vadd.f32 0.0, %v1325
        %v1327 = vpop.f32.mrb[0].mxu0
        %1328 = vmatprep.mubr.f32.mxu0 %v327
        %1329 = vmatmul.mubr.f32.gmra.mrb[0].mxu0 %v326
        %v1330 = vpop.f32.mrb[0].mxu0
        %v1331 = vadd.f32 0.0, %v1330
        %v1332 = vpop.f32.mrb[0].mxu0
        %1333 = vmatprep.mubr.f32.mxu0 %v329
        %1334 = vmatmul.mubr.f32.gmra.mrb[0].mxu0 %v328
        %v1335 = vpop.f32.mrb[0].mxu0
        %v1336 = vadd.f32 0.0, %v1335
        %v1337 = vpop.f32.mrb[0].mxu0
        %1338 = vmatprep.mubr.f32.mxu0 %v331
        %1339 = vmatmul.mubr.f32.gmra.mrb[0].mxu0 %v330
        %v1340 = vpop.f32.mrb[0].mxu0
        %v1341 = vadd.f32 0.0, %v1340
        %v1342 = vpop.f32.mrb[0].mxu0
        %1343 = vmatprep.mubr.f32.mxu0 %v333
        %1344 = vmatmul.mubr.f32.gmra.mrb[0].mxu0 %v332
        %v1345 = vpop.f32.mrb[0].mxu0
        %v1346 = vadd.f32 0.0, %v1345
        %v1347 = vpop.f32.mrb[0].mxu0
        %1348 = vmatprep.mubr.f32.mxu0 %v335
        %1349 = vmatmul.mubr.f32.gmra.mrb[0].mxu0 %v334
        %v1350 = vpop.f32.mrb[0].mxu0
        %v1351 = vadd.f32 0.0, %v1350
        %v1352 = vpop.f32.mrb[0].mxu0
        %1353 = vmatprep.mubr.f32.mxu0 %v337
        %1354 = vmatmul.mubr.f32.gmra.mrb[0].mxu0 %v336
        %v1355 = vpop.f32.mrb[0].mxu0
        %v1356 = vadd.f32 0.0, %v1355
        %v1357 = vpop.f32.mrb[0].mxu0
        %1358 = vmatprep.mubr.f32.mxu0 %v339
        %1359 = vmatmul.mubr.f32.gmra.mrb[0].mxu0 %v338
        %v1360 = vpop.f32.mrb[0].mxu0
        %v1361 = vadd.f32 0.0, %v1360
        %v1362 = vpop.f32.mrb[0].mxu0
        %1363 = vmatprep.mubr.f32.mxu0 %v341
        %1364 = vmatmul.mubr.f32.gmra.mrb[0].mxu0 %v340
        %v1365 = vpop.f32.mrb[0].mxu0
        %v1366 = vadd.f32 0.0, %v1365
        %v1367 = vpop.f32.mrb[0].mxu0
        %1368 = vdwg.mxu0
        %1369 = vmatprep.subr.mxu0 %v1163
        %1370 = vmatpush1.xpose.msra.mxu0 %v1161
        %1371 = vmatprep.subr.mxu0 %v1167
        %1372 = vmatpush1.xpose.msra.mxu0 %v1165
        %1373 = vmatprep.subr.mxu0 %v1171
        %1374 = vmatpush1.xpose.msra.mxu0 %v1169
        %1375 = vmatprep.subr.mxu0 %v1175
        %1376 = vmatpush1.xpose.msra.mxu0 %v1173
        %1377 = vmatprep.subr.mxu0 %v1179
        %1378 = vmatpush1.xpose.msra.mxu0 %v1177
        %1379 = vmatprep.subr.mxu0 %v1183
        %1380 = vmatpush1.xpose.msra.mxu0 %v1181
        %1381 = vmatprep.subr.mxu0 %v1187
        %1382 = vmatpush1.xpose.msra.mxu0 %v1185
        %1383 = vmatprep.subr.mxu0 %v1191
        %1384 = vmatpush1.xpose.msra.mxu0 %v1189
        %1385 = vmatprep.subr.mxu0 %v1195
        %1386 = vmatpush1.xpose.msra.mxu0 %v1193
        %1387 = vmatprep.subr.mxu0 %v1199
        %1388 = vmatpush1.xpose.msra.mxu0 %v1197
        %1389 = vmatprep.subr.mxu0 %v1203
        %1390 = vmatpush1.xpose.msra.mxu0 %v1201
        %1391 = vmatprep.subr.mxu0 %v1207
        %1392 = vmatpush1.xpose.msra.mxu0 %v1205
        %1393 = vmatprep.subr.mxu0 %v1211
        %1394 = vmatpush1.xpose.msra.mxu0 %v1209
        %1395 = vmatprep.subr.mxu0 %v1215
        %1396 = vmatpush1.xpose.msra.mxu0 %v1213
        %1397 = vmatprep.subr.mxu0 %v1219
        %1398 = vmatpush1.xpose.msra.mxu0 %v1217
        %1399 = vmatprep.subr.mxu0 %v1223
        %1400 = vmatpush1.xpose.msra.mxu0 %v1221
        %1401 = vmatprep.subr.mxu0 0.0
        %1402 = vmatpush1.xpose.msra.mxu0 0.0
        %1403 = vmatprep.subr.mxu0 0.0
        %1404 = vmatpush1.xpose.msra.mxu0 0.0
        %1405 = vmatprep.subr.mxu0 0.0
        %1406 = vmatpush1.xpose.msra.mxu0 0.0
        %1407 = vmatprep.subr.mxu0 0.0
        %1408 = vmatpush1.xpose.msra.mxu0 0.0
        %1409 = vmatprep.subr.mxu0 0.0
        %1410 = vmatpush1.xpose.msra.mxu0 0.0
        %1411 = vmatprep.subr.mxu0 0.0
        %1412 = vmatpush1.xpose.msra.mxu0 0.0
        %1413 = vmatprep.subr.mxu0 0.0
        %1414 = vmatpush1.xpose.msra.mxu0 0.0
        %1415 = vmatprep.subr.mxu0 0.0
        %1416 = vmatpush1.xpose.msra.mxu0 0.0
        %1417 = vmatprep.subr.mxu0 0.0
        %1418 = vmatpush1.xpose.msra.mxu0 0.0
        %1419 = vmatprep.subr.mxu0 0.0
        %1420 = vmatpush1.xpose.msra.mxu0 0.0
        %1421 = vmatprep.subr.mxu0 0.0
        %1422 = vmatpush1.xpose.msra.mxu0 0.0
        %1423 = vmatprep.subr.mxu0 0.0
        %1424 = vmatpush1.xpose.msra.mxu0 0.0
        %1425 = vmatprep.subr.mxu0 0.0
        %1426 = vmatpush1.xpose.msra.mxu0 0.0
        %1427 = vmatprep.subr.mxu0 0.0
        %1428 = vmatpush1.xpose.msra.mxu0 0.0
        %1429 = vmatprep.subr.mxu0 0.0
        %1430 = vmatpush1.xpose.msra.mxu0 0.0
        %1431 = vmatprep.subr.mxu0 0.0
        %1432 = vmatpush1.xpose.msra.mxu0 0.0
        %1433 = vmatprep.mubr.f32.mxu0 1.0
        %1434 = vmatmul.mubr.f32.gmra.mrb[0].mxu0 1.0
        %v1435 = vpop.f32.mrb[0].mxu0
        %v1436 = vadd.f32 0.0, %v1435
        %v1437 = vpop.f32.mrb[0].mxu0
        %1438 = vdwg.mxu0
        %v1439 = vrcp.pop %v1436
        %v1440 = vmul.f32 1.0, %v1439
        %v1441 = vlaneseq
        %v1442 = vshrl.u32 %v1441, 7
        %v1443 = vsub.s32 0, %v1442
        %v1444 = vrot.slane %v1440, %v1443
        %v1445 = vmul.f32 %v1291, %v1444
        %v1446 = vmul.f32 %v1296, %v1444
        %v1447 = vmul.f32 %v1301, %v1444
        %v1448 = vmul.f32 %v1306, %v1444
        %v1449 = vmul.f32 %v1311, %v1444
        %v1450 = vmul.f32 %v1316, %v1444
        %v1451 = vmul.f32 %v1321, %v1444
        %v1452 = vmul.f32 %v1326, %v1444
        %v1453 = vmul.f32 %v1331, %v1444
        %v1454 = vmul.f32 %v1336, %v1444
        %v1455 = vmul.f32 %v1341, %v1444
        %v1456 = vmul.f32 %v1346, %v1444
        %v1457 = vmul.f32 %v1351, %v1444
        %v1458 = vmul.f32 %v1356, %v1444
        %v1459 = vmul.f32 %v1361, %v1444
        %v1460 = vmul.f32 %v1366, %v1444
        %1461 = vst [vmem:[%s243] sm:$0xff] %v1445
        %1462 = vst [vmem:[%s243 + $0x8] sm:$0xff] %v1446
        %1463 = vst [vmem:[%s243 + $0x10] sm:$0xff] %v1447
        %1464 = vst [vmem:[%s243 + $0x18] sm:$0xff] %v1448
        %1465 = vst [vmem:[%s243 + $0x20] sm:$0xff] %v1449
        %1466 = vst [vmem:[%s243 + $0x28] sm:$0xff] %v1450
        %1467 = vst [vmem:[%s243 + $0x30] sm:$0xff] %v1451
        %1468 = vst [vmem:[%s243 + $0x38] sm:$0xff] %v1452
        %1469 = vst [vmem:[%s243 + $0x40] sm:$0xff] %v1453
        %1470 = vst [vmem:[%s243 + $0x48] sm:$0xff] %v1454
        %1471 = vst [vmem:[%s243 + $0x50] sm:$0xff] %v1455
        %1472 = vst [vmem:[%s243 + $0x58] sm:$0xff] %v1456
        %1473 = vst [vmem:[%s243 + $0x60] sm:$0xff] %v1457
        %1474 = vst [vmem:[%s243 + $0x68] sm:$0xff] %v1458
        %1475 = vst [vmem:[%s243 + $0x70] sm:$0xff] %v1459
        %1476 = vst [vmem:[%s243 + $0x78] sm:$0xff] %v1460
        %s1477 = scalar_lea.vmem %s217, 256 [#allocation2]
        %v1478 = vld [vmem:[%s1477] sm:$0xff]
        %v1479 = vld [vmem:[%s1477 + $0x8] sm:$0xff]
        %v1480 = vld [vmem:[%s1477 + $0x10] sm:$0xff]
        %v1481 = vld [vmem:[%s1477 + $0x18] sm:$0xff]
        %v1482 = vld [vmem:[%s1477 + $0x20] sm:$0xff]
        %v1483 = vld [vmem:[%s1477 + $0x28] sm:$0xff]
        %v1484 = vld [vmem:[%s1477 + $0x30] sm:$0xff]
        %v1485 = vld [vmem:[%s1477 + $0x38] sm:$0xff]
        %v1486 = vld [vmem:[%s1477 + $0x40] sm:$0xff]
        %v1487 = vld [vmem:[%s1477 + $0x48] sm:$0xff]
        %v1488 = vld [vmem:[%s1477 + $0x50] sm:$0xff]
        %v1489 = vld [vmem:[%s1477 + $0x58] sm:$0xff]
        %v1490 = vld [vmem:[%s1477 + $0x60] sm:$0xff]
        %v1491 = vld [vmem:[%s1477 + $0x68] sm:$0xff]
        %v1492 = vld [vmem:[%s1477 + $0x70] sm:$0xff]
        %v1493 = vld [vmem:[%s1477 + $0x78] sm:$0xff]
        %v1494 = vld [vmem:[%s1477 + $0x80] sm:$0xff]
        %v1495 = vld [vmem:[%s1477 + $0x88] sm:$0xff]
        %v1496 = vld [vmem:[%s1477 + $0x90] sm:$0xff]
        %v1497 = vld [vmem:[%s1477 + $0x98] sm:$0xff]
        %v1498 = vld [vmem:[%s1477 + $0xa0] sm:$0xff]
        %v1499 = vld [vmem:[%s1477 + $0xa8] sm:$0xff]
        %v1500 = vld [vmem:[%s1477 + $0xb0] sm:$0xff]
        %v1501 = vld [vmem:[%s1477 + $0xb8] sm:$0xff]
        %v1502 = vld [vmem:[%s1477 + $0xc0] sm:$0xff]
        %v1503 = vld [vmem:[%s1477 + $0xc8] sm:$0xff]
        %v1504 = vld [vmem:[%s1477 + $0xd0] sm:$0xff]
        %v1505 = vld [vmem:[%s1477 + $0xd8] sm:$0xff]
        %v1506 = vld [vmem:[%s1477 + $0xe0] sm:$0xff]
        %v1507 = vld [vmem:[%s1477 + $0xe8] sm:$0xff]
        %v1508 = vld [vmem:[%s1477 + $0xf0] sm:$0xff]
        %v1509 = vld [vmem:[%s1477 + $0xf8] sm:$0xff]
        %v1510 = vadd.f32 %v1478, %v1479
        %1511 = vadd.xlane.f32.xlu0 %v1510
        %v1512 = vpop.xlane.xlu0 %1511
        %v1513 = vadd.f32 %v1480, %v1481
        %1514 = vadd.xlane.f32.xlu0 %v1513
        %v1515 = vpop.xlane.xlu0 %1514
        %v1516 = vadd.f32 %v1482, %v1483
        %1517 = vadd.xlane.f32.xlu0 %v1516
        %v1518 = vpop.xlane.xlu0 %1517
        %v1519 = vadd.f32 %v1484, %v1485
        %1520 = vadd.xlane.f32.xlu0 %v1519
        %v1521 = vpop.xlane.xlu0 %1520
        %v1522 = vadd.f32 %v1486, %v1487
        %1523 = vadd.xlane.f32.xlu0 %v1522
        %v1524 = vpop.xlane.xlu0 %1523
        %v1525 = vadd.f32 %v1488, %v1489
        %1526 = vadd.xlane.f32.xlu0 %v1525
        %v1527 = vpop.xlane.xlu0 %1526
        %v1528 = vadd.f32 %v1490, %v1491
        %1529 = vadd.xlane.f32.xlu0 %v1528
        %v1530 = vpop.xlane.xlu0 %1529
        %v1531 = vadd.f32 %v1492, %v1493
        %1532 = vadd.xlane.f32.xlu0 %v1531
        %v1533 = vpop.xlane.xlu0 %1532
        %v1534 = vadd.f32 %v1494, %v1495
        %1535 = vadd.xlane.f32.xlu0 %v1534
        %v1536 = vpop.xlane.xlu0 %1535
        %v1537 = vadd.f32 %v1496, %v1497
        %1538 = vadd.xlane.f32.xlu0 %v1537
        %v1539 = vpop.xlane.xlu0 %1538
        %v1540 = vadd.f32 %v1498, %v1499
        %1541 = vadd.xlane.f32.xlu0 %v1540
        %v1542 = vpop.xlane.xlu0 %1541
        %v1543 = vadd.f32 %v1500, %v1501
        %1544 = vadd.xlane.f32.xlu0 %v1543
        %v1545 = vpop.xlane.xlu0 %1544
        %v1546 = vadd.f32 %v1502, %v1503
        %1547 = vadd.xlane.f32.xlu0 %v1546
        %v1548 = vpop.xlane.xlu0 %1547
        %v1549 = vadd.f32 %v1504, %v1505
        %1550 = vadd.xlane.f32.xlu0 %v1549
        %v1551 = vpop.xlane.xlu0 %1550
        %v1552 = vadd.f32 %v1506, %v1507
        %1553 = vadd.xlane.f32.xlu0 %v1552
        %v1554 = vpop.xlane.xlu0 %1553
        %v1555 = vadd.f32 %v1508, %v1509
        %1556 = vadd.xlane.f32.xlu0 %v1555
        %v1557 = vpop.xlane.xlu0 %1556
        %v1558 = vmul.f32 %v1512, %v390
        %v1559 = vmul.f32 %v1515, %v390
        %v1560 = vmul.f32 %v1518, %v390
        %v1561 = vmul.f32 %v1521, %v390
        %v1562 = vmul.f32 %v1524, %v390
        %v1563 = vmul.f32 %v1527, %v390
        %v1564 = vmul.f32 %v1530, %v390
        %v1565 = vmul.f32 %v1533, %v390
        %v1566 = vmul.f32 %v1536, %v390
        %v1567 = vmul.f32 %v1539, %v390
        %v1568 = vmul.f32 %v1542, %v390
        %v1569 = vmul.f32 %v1545, %v390
        %v1570 = vmul.f32 %v1548, %v390
        %v1571 = vmul.f32 %v1551, %v390
        %v1572 = vmul.f32 %v1554, %v390
        %v1573 = vmul.f32 %v1557, %v390
        %v1574 = vsub.f32 %v1478, %v1558
        %v1575 = vsub.f32 %v1479, %v1558
        %v1576 = vsub.f32 %v1480, %v1559
        %v1577 = vsub.f32 %v1481, %v1559
        %v1578 = vsub.f32 %v1482, %v1560
        %v1579 = vsub.f32 %v1483, %v1560
        %v1580 = vsub.f32 %v1484, %v1561
        %v1581 = vsub.f32 %v1485, %v1561
        %v1582 = vsub.f32 %v1486, %v1562
        %v1583 = vsub.f32 %v1487, %v1562
        %v1584 = vsub.f32 %v1488, %v1563
        %v1585 = vsub.f32 %v1489, %v1563
        %v1586 = vsub.f32 %v1490, %v1564
        %v1587 = vsub.f32 %v1491, %v1564
        %v1588 = vsub.f32 %v1492, %v1565
        %v1589 = vsub.f32 %v1493, %v1565
        %v1590 = vsub.f32 %v1494, %v1566
        %v1591 = vsub.f32 %v1495, %v1566
        %v1592 = vsub.f32 %v1496, %v1567
        %v1593 = vsub.f32 %v1497, %v1567
        %v1594 = vsub.f32 %v1498, %v1568
        %v1595 = vsub.f32 %v1499, %v1568
        %v1596 = vsub.f32 %v1500, %v1569
        %v1597 = vsub.f32 %v1501, %v1569
        %v1598 = vsub.f32 %v1502, %v1570
        %v1599 = vsub.f32 %v1503, %v1570
        %v1600 = vsub.f32 %v1504, %v1571
        %v1601 = vsub.f32 %v1505, %v1571
        %v1602 = vsub.f32 %v1506, %v1572
        %v1603 = vsub.f32 %v1507, %v1572
        %v1604 = vsub.f32 %v1508, %v1573
        %v1605 = vsub.f32 %v1509, %v1573
        %v1606 = vmul.f32 %v1574, %v1574
        %v1607 = vmul.f32 %v1575, %v1575
        %v1608 = vmul.f32 %v1576, %v1576
        %v1609 = vmul.f32 %v1577, %v1577
        %v1610 = vmul.f32 %v1578, %v1578
        %v1611 = vmul.f32 %v1579, %v1579
        %v1612 = vmul.f32 %v1580, %v1580
        %v1613 = vmul.f32 %v1581, %v1581
        %v1614 = vmul.f32 %v1582, %v1582
        %v1615 = vmul.f32 %v1583, %v1583
        %v1616 = vmul.f32 %v1584, %v1584
        %v1617 = vmul.f32 %v1585, %v1585
        %v1618 = vmul.f32 %v1586, %v1586
        %v1619 = vmul.f32 %v1587, %v1587
        %v1620 = vmul.f32 %v1588, %v1588
        %v1621 = vmul.f32 %v1589, %v1589
        %v1622 = vmul.f32 %v1590, %v1590
        %v1623 = vmul.f32 %v1591, %v1591
        %v1624 = vmul.f32 %v1592, %v1592
        %v1625 = vmul.f32 %v1593, %v1593
        %v1626 = vmul.f32 %v1594, %v1594
        %v1627 = vmul.f32 %v1595, %v1595
        %v1628 = vmul.f32 %v1596, %v1596
        %v1629 = vmul.f32 %v1597, %v1597
        %v1630 = vmul.f32 %v1598, %v1598
        %v1631 = vmul.f32 %v1599, %v1599
        %v1632 = vmul.f32 %v1600, %v1600
        %v1633 = vmul.f32 %v1601, %v1601
        %v1634 = vmul.f32 %v1602, %v1602
        %v1635 = vmul.f32 %v1603, %v1603
        %v1636 = vmul.f32 %v1604, %v1604
        %v1637 = vmul.f32 %v1605, %v1605
        %v1638 = vadd.f32 %v1606, %v1607
        %1639 = vadd.xlane.f32.xlu0 %v1638
        %v1640 = vpop.xlane.xlu0 %1639
        %v1641 = vadd.f32 %v1608, %v1609
        %1642 = vadd.xlane.f32.xlu0 %v1641
        %v1643 = vpop.xlane.xlu0 %1642
        %v1644 = vadd.f32 %v1610, %v1611
        %1645 = vadd.xlane.f32.xlu0 %v1644
        %v1646 = vpop.xlane.xlu0 %1645
        %v1647 = vadd.f32 %v1612, %v1613
        %1648 = vadd.xlane.f32.xlu0 %v1647
        %v1649 = vpop.xlane.xlu0 %1648
        %v1650 = vadd.f32 %v1614, %v1615
        %1651 = vadd.xlane.f32.xlu0 %v1650
        %v1652 = vpop.xlane.xlu0 %1651
        %v1653 = vadd.f32 %v1616, %v1617
        %1654 = vadd.xlane.f32.xlu0 %v1653
        %v1655 = vpop.xlane.xlu0 %1654
        %v1656 = vadd.f32 %v1618, %v1619
        %1657 = vadd.xlane.f32.xlu0 %v1656
        %v1658 = vpop.xlane.xlu0 %1657
        %v1659 = vadd.f32 %v1620, %v1621
        %1660 = vadd.xlane.f32.xlu0 %v1659
        %v1661 = vpop.xlane.xlu0 %1660
        %v1662 = vadd.f32 %v1622, %v1623
        %1663 = vadd.xlane.f32.xlu0 %v1662
        %v1664 = vpop.xlane.xlu0 %1663
        %v1665 = vadd.f32 %v1624, %v1625
        %1666 = vadd.xlane.f32.xlu0 %v1665
        %v1667 = vpop.xlane.xlu0 %1666
        %v1668 = vadd.f32 %v1626, %v1627
        %1669 = vadd.xlane.f32.xlu0 %v1668
        %v1670 = vpop.xlane.xlu0 %1669
        %v1671 = vadd.f32 %v1628, %v1629
        %1672 = vadd.xlane.f32.xlu0 %v1671
        %v1673 = vpop.xlane.xlu0 %1672
        %v1674 = vadd.f32 %v1630, %v1631
        %1675 = vadd.xlane.f32.xlu0 %v1674
        %v1676 = vpop.xlane.xlu0 %1675
        %v1677 = vadd.f32 %v1632, %v1633
        %1678 = vadd.xlane.f32.xlu0 %v1677
        %v1679 = vpop.xlane.xlu0 %1678
        %v1680 = vadd.f32 %v1634, %v1635
        %1681 = vadd.xlane.f32.xlu0 %v1680
        %v1682 = vpop.xlane.xlu0 %1681
        %v1683 = vadd.f32 %v1636, %v1637
        %1684 = vadd.xlane.f32.xlu0 %v1683
        %v1685 = vpop.xlane.xlu0 %1684
        %v1686 = vmul.f32 %v1640, %v390
        %v1687 = vmul.f32 %v1643, %v390
        %v1688 = vmul.f32 %v1646, %v390
        %v1689 = vmul.f32 %v1649, %v390
        %v1690 = vmul.f32 %v1652, %v390
        %v1691 = vmul.f32 %v1655, %v390
        %v1692 = vmul.f32 %v1658, %v390
        %v1693 = vmul.f32 %v1661, %v390
        %v1694 = vmul.f32 %v1664, %v390
        %v1695 = vmul.f32 %v1667, %v390
        %v1696 = vmul.f32 %v1670, %v390
        %v1697 = vmul.f32 %v1673, %v390
        %v1698 = vmul.f32 %v1676, %v390
        %v1699 = vmul.f32 %v1679, %v390
        %v1700 = vmul.f32 %v1682, %v390
        %v1701 = vmul.f32 %v1685, %v390
        %v1702 = vadd.f32 %v1686, 0.001
        %v1703 = vadd.f32 %v1687, 0.001
        %v1704 = vadd.f32 %v1688, 0.001
        %v1705 = vadd.f32 %v1689, 0.001
        %v1706 = vadd.f32 %v1690, 0.001
        %v1707 = vadd.f32 %v1691, 0.001
        %v1708 = vadd.f32 %v1692, 0.001
        %v1709 = vadd.f32 %v1693, 0.001
        %v1710 = vadd.f32 %v1694, 0.001
        %v1711 = vadd.f32 %v1695, 0.001
        %v1712 = vadd.f32 %v1696, 0.001
        %v1713 = vadd.f32 %v1697, 0.001
        %v1714 = vadd.f32 %v1698, 0.001
        %v1715 = vadd.f32 %v1699, 0.001
        %v1716 = vadd.f32 %v1700, 0.001
        %v1717 = vadd.f32 %v1701, 0.001
        %v1718 = vrsqrt.pop %v1702
        %v1719 = vrsqrt.pop %v1703
        %v1720 = vrsqrt.pop %v1704
        %v1721 = vrsqrt.pop %v1705
        %v1722 = vrsqrt.pop %v1706
        %v1723 = vrsqrt.pop %v1707
        %v1724 = vrsqrt.pop %v1708
        %v1725 = vrsqrt.pop %v1709
        %v1726 = vrsqrt.pop %v1710
        %v1727 = vrsqrt.pop %v1711
        %v1728 = vrsqrt.pop %v1712
        %v1729 = vrsqrt.pop %v1713
        %v1730 = vrsqrt.pop %v1714
        %v1731 = vrsqrt.pop %v1715
        %v1732 = vrsqrt.pop %v1716
        %v1733 = vrsqrt.pop %v1717
        %v1734 = vmul.f32 %v1718, %v278
        %v1735 = vmul.f32 %v1719, %v279
        %v1736 = vmul.f32 %v1720, %v280
        %v1737 = vmul.f32 %v1721, %v281
        %v1738 = vmul.f32 %v1722, %v282
        %v1739 = vmul.f32 %v1723, %v283
        %v1740 = vmul.f32 %v1724, %v284
        %v1741 = vmul.f32 %v1725, %v285
        %v1742 = vmul.f32 %v1726, %v286
        %v1743 = vmul.f32 %v1727, %v287
        %v1744 = vmul.f32 %v1728, %v288
        %v1745 = vmul.f32 %v1729, %v289
        %v1746 = vmul.f32 %v1730, %v290
        %v1747 = vmul.f32 %v1731, %v291
        %v1748 = vmul.f32 %v1732, %v292
        %v1749 = vmul.f32 %v1733, %v293
        %1751 = vset.pattern.permute.xlu0 0
        %1752 = vperm.xlu0 %1751, %v1734
        %v1753 = vpop.permute.xlu0 %1752
        %1756 = vset.pattern.permute.xlu0 0
        %1757 = vperm.xlu0 %1756, %v1735
        %v1758 = vpop.permute.xlu0 %1757
        %1761 = vset.pattern.permute.xlu0 0
        %1762 = vperm.xlu0 %1761, %v1736
        %v1763 = vpop.permute.xlu0 %1762
        %1766 = vset.pattern.permute.xlu0 0
        %1767 = vperm.xlu0 %1766, %v1737
        %v1768 = vpop.permute.xlu0 %1767
        %1771 = vset.pattern.permute.xlu0 0
        %1772 = vperm.xlu0 %1771, %v1738
        %v1773 = vpop.permute.xlu0 %1772
        %1776 = vset.pattern.permute.xlu0 0
        %1777 = vperm.xlu0 %1776, %v1739
        %v1778 = vpop.permute.xlu0 %1777
        %1781 = vset.pattern.permute.xlu0 0
        %1782 = vperm.xlu0 %1781, %v1740
        %v1783 = vpop.permute.xlu0 %1782
        %1786 = vset.pattern.permute.xlu0 0
        %1787 = vperm.xlu0 %1786, %v1741
        %v1788 = vpop.permute.xlu0 %1787
        %1791 = vset.pattern.permute.xlu0 0
        %1792 = vperm.xlu0 %1791, %v1742
        %v1793 = vpop.permute.xlu0 %1792
        %1796 = vset.pattern.permute.xlu0 0
        %1797 = vperm.xlu0 %1796, %v1743
        %v1798 = vpop.permute.xlu0 %1797
        %1801 = vset.pattern.permute.xlu0 0
        %1802 = vperm.xlu0 %1801, %v1744
        %v1803 = vpop.permute.xlu0 %1802
        %1806 = vset.pattern.permute.xlu0 0
        %1807 = vperm.xlu0 %1806, %v1745
        %v1808 = vpop.permute.xlu0 %1807
        %1811 = vset.pattern.permute.xlu0 0
        %1812 = vperm.xlu0 %1811, %v1746
        %v1813 = vpop.permute.xlu0 %1812
        %1816 = vset.pattern.permute.xlu0 0
        %1817 = vperm.xlu0 %1816, %v1747
        %v1818 = vpop.permute.xlu0 %1817
        %1821 = vset.pattern.permute.xlu0 0
        %1822 = vperm.xlu0 %1821, %v1748
        %v1823 = vpop.permute.xlu0 %1822
        %1826 = vset.pattern.permute.xlu0 0
        %1827 = vperm.xlu0 %1826, %v1749
        %v1828 = vpop.permute.xlu0 %1827
        %v1830 = vmul.f32 %v1574, %v1753
        %v1831 = vmul.f32 %v1575, %v1753
        %v1832 = vmul.f32 %v1576, %v1758
        %v1833 = vmul.f32 %v1577, %v1758
        %v1834 = vmul.f32 %v1578, %v1763
        %v1835 = vmul.f32 %v1579, %v1763
        %v1836 = vmul.f32 %v1580, %v1768
        %v1837 = vmul.f32 %v1581, %v1768
        %v1838 = vmul.f32 %v1582, %v1773
        %v1839 = vmul.f32 %v1583, %v1773
        %v1840 = vmul.f32 %v1584, %v1778
        %v1841 = vmul.f32 %v1585, %v1778
        %v1842 = vmul.f32 %v1586, %v1783
        %v1843 = vmul.f32 %v1587, %v1783
        %v1844 = vmul.f32 %v1588, %v1788
        %v1845 = vmul.f32 %v1589, %v1788
        %v1846 = vmul.f32 %v1590, %v1793
        %v1847 = vmul.f32 %v1591, %v1793
        %v1848 = vmul.f32 %v1592, %v1798
        %v1849 = vmul.f32 %v1593, %v1798
        %v1850 = vmul.f32 %v1594, %v1803
        %v1851 = vmul.f32 %v1595, %v1803
        %v1852 = vmul.f32 %v1596, %v1808
        %v1853 = vmul.f32 %v1597, %v1808
        %v1854 = vmul.f32 %v1598, %v1813
        %v1855 = vmul.f32 %v1599, %v1813
        %v1856 = vmul.f32 %v1600, %v1818
        %v1857 = vmul.f32 %v1601, %v1818
        %v1858 = vmul.f32 %v1602, %v1823
        %v1859 = vmul.f32 %v1603, %v1823
        %v1860 = vmul.f32 %v1604, %v1828
        %v1861 = vmul.f32 %v1605, %v1828
        %v1862 = vadd.f32 %v1830, %v698
        %v1863 = vadd.f32 %v1831, %v698
        %v1864 = vadd.f32 %v1832, %v703
        %v1865 = vadd.f32 %v1833, %v703
        %v1866 = vadd.f32 %v1834, %v708
        %v1867 = vadd.f32 %v1835, %v708
        %v1868 = vadd.f32 %v1836, %v713
        %v1869 = vadd.f32 %v1837, %v713
        %v1870 = vadd.f32 %v1838, %v718
        %v1871 = vadd.f32 %v1839, %v718
        %v1872 = vadd.f32 %v1840, %v723
        %v1873 = vadd.f32 %v1841, %v723
        %v1874 = vadd.f32 %v1842, %v728
        %v1875 = vadd.f32 %v1843, %v728
        %v1876 = vadd.f32 %v1844, %v733
        %v1877 = vadd.f32 %v1845, %v733
        %v1878 = vadd.f32 %v1846, %v738
        %v1879 = vadd.f32 %v1847, %v738
        %v1880 = vadd.f32 %v1848, %v743
        %v1881 = vadd.f32 %v1849, %v743
        %v1882 = vadd.f32 %v1850, %v748
        %v1883 = vadd.f32 %v1851, %v748
        %v1884 = vadd.f32 %v1852, %v753
        %v1885 = vadd.f32 %v1853, %v753
        %v1886 = vadd.f32 %v1854, %v758
        %v1887 = vadd.f32 %v1855, %v758
        %v1888 = vadd.f32 %v1856, %v763
        %v1889 = vadd.f32 %v1857, %v763
        %v1890 = vadd.f32 %v1858, %v768
        %v1891 = vadd.f32 %v1859, %v768
        %v1892 = vadd.f32 %v1860, %v773
        %v1893 = vadd.f32 %v1861, %v773
        %v1894 = vmax.f32 %v1862, 0.0
        %v1895 = vmax.f32 %v1863, 0.0
        %v1896 = vmax.f32 %v1864, 0.0
        %v1897 = vmax.f32 %v1865, 0.0
        %v1898 = vmax.f32 %v1866, 0.0
        %v1899 = vmax.f32 %v1867, 0.0
        %v1900 = vmax.f32 %v1868, 0.0
        %v1901 = vmax.f32 %v1869, 0.0
        %v1902 = vmax.f32 %v1870, 0.0
        %v1903 = vmax.f32 %v1871, 0.0
        %v1904 = vmax.f32 %v1872, 0.0
        %v1905 = vmax.f32 %v1873, 0.0
        %v1906 = vmax.f32 %v1874, 0.0
        %v1907 = vmax.f32 %v1875, 0.0
        %v1908 = vmax.f32 %v1876, 0.0
        %v1909 = vmax.f32 %v1877, 0.0
        %v1910 = vmax.f32 %v1878, 0.0
        %v1911 = vmax.f32 %v1879, 0.0
        %v1912 = vmax.f32 %v1880, 0.0
        %v1913 = vmax.f32 %v1881, 0.0
        %v1914 = vmax.f32 %v1882, 0.0
        %v1915 = vmax.f32 %v1883, 0.0
        %v1916 = vmax.f32 %v1884, 0.0
        %v1917 = vmax.f32 %v1885, 0.0
        %v1918 = vmax.f32 %v1886, 0.0
        %v1919 = vmax.f32 %v1887, 0.0
        %v1920 = vmax.f32 %v1888, 0.0
        %v1921 = vmax.f32 %v1889, 0.0
        %v1922 = vmax.f32 %v1890, 0.0
        %v1923 = vmax.f32 %v1891, 0.0
        %v1924 = vmax.f32 %v1892, 0.0
        %v1925 = vmax.f32 %v1893, 0.0
        %1926 = vmatprep.subr.mxu0 %v1895
        %1927 = vmatpush1.msra.mxu0 %v1894
        %1928 = vmatprep.subr.mxu0 %v1897
        %1929 = vmatpush1.msra.mxu0 %v1896
        %1930 = vmatprep.subr.mxu0 %v1899
        %1931 = vmatpush1.msra.mxu0 %v1898
        %1932 = vmatprep.subr.mxu0 %v1901
        %1933 = vmatpush1.msra.mxu0 %v1900
        %1934 = vmatprep.subr.mxu0 %v1903
        %1935 = vmatpush1.msra.mxu0 %v1902
        %1936 = vmatprep.subr.mxu0 %v1905
        %1937 = vmatpush1.msra.mxu0 %v1904
        %1938 = vmatprep.subr.mxu0 %v1907
        %1939 = vmatpush1.msra.mxu0 %v1906
        %1940 = vmatprep.subr.mxu0 %v1909
        %1941 = vmatpush1.msra.mxu0 %v1908
        %1942 = vmatprep.subr.mxu0 %v1911
        %1943 = vmatpush1.msra.mxu0 %v1910
        %1944 = vmatprep.subr.mxu0 %v1913
        %1945 = vmatpush1.msra.mxu0 %v1912
        %1946 = vmatprep.subr.mxu0 %v1915
        %1947 = vmatpush1.msra.mxu0 %v1914
        %1948 = vmatprep.subr.mxu0 %v1917
        %1949 = vmatpush1.msra.mxu0 %v1916
        %1950 = vmatprep.subr.mxu0 %v1919
        %1951 = vmatpush1.msra.mxu0 %v1918
        %1952 = vmatprep.subr.mxu0 %v1921
        %1953 = vmatpush1.msra.mxu0 %v1920
        %1954 = vmatprep.subr.mxu0 %v1923
        %1955 = vmatpush1.msra.mxu0 %v1922
        %1956 = vmatprep.subr.mxu0 %v1925
        %1957 = vmatpush1.msra.mxu0 %v1924
        %1958 = vmatprep.subr.mxu0 0.0
        %1959 = vmatpush1.msra.mxu0 0.0
        %1960 = vmatprep.subr.mxu0 0.0
        %1961 = vmatpush1.msra.mxu0 0.0
        %1962 = vmatprep.subr.mxu0 0.0
        %1963 = vmatpush1.msra.mxu0 0.0
        %1964 = vmatprep.subr.mxu0 0.0
        %1965 = vmatpush1.msra.mxu0 0.0
        %1966 = vmatprep.subr.mxu0 0.0
        %1967 = vmatpush1.msra.mxu0 0.0
        %1968 = vmatprep.subr.mxu0 0.0
        %1969 = vmatpush1.msra.mxu0 0.0
        %1970 = vmatprep.subr.mxu0 0.0
        %1971 = vmatpush1.msra.mxu0 0.0
        %1972 = vmatprep.subr.mxu0 0.0
        %1973 = vmatpush1.msra.mxu0 0.0
        %1974 = vmatprep.subr.mxu0 0.0
        %1975 = vmatpush1.msra.mxu0 0.0
        %1976 = vmatprep.subr.mxu0 0.0
        %1977 = vmatpush1.msra.mxu0 0.0
        %1978 = vmatprep.subr.mxu0 0.0
        %1979 = vmatpush1.msra.mxu0 0.0
        %1980 = vmatprep.subr.mxu0 0.0
        %1981 = vmatpush1.msra.mxu0 0.0
        %1982 = vmatprep.subr.mxu0 0.0
        %1983 = vmatpush1.msra.mxu0 0.0
        %1984 = vmatprep.subr.mxu0 0.0
        %1985 = vmatpush1.msra.mxu0 0.0
        %1986 = vmatprep.subr.mxu0 0.0
        %1987 = vmatpush1.msra.mxu0 0.0
        %1988 = vmatprep.subr.mxu0 0.0
        %1989 = vmatpush1.msra.mxu0 0.0
        %1990 = vmatprep.mubr.f32.mxu0 0.0
        %1991 = vmatmul.mubr.f32.gmra.mrb[0].mxu0 %v246
        %v1992 = vpop.f32.mrb[0].mxu0
        %v1993 = vadd.f32 %v842, %v1992
        %v1994 = vpop.f32.mrb[0].mxu0
        %v1995 = vadd.f32 %v842, %v1994
        %1996 = vmatprep.mubr.f32.mxu0 0.0
        %1997 = vmatmul.mubr.f32.gmra.mrb[0].mxu0 %v247
        %v1998 = vpop.f32.mrb[0].mxu0
        %v1999 = vadd.f32 %v847, %v1998
        %v2000 = vpop.f32.mrb[0].mxu0
        %v2001 = vadd.f32 %v847, %v2000
        %2002 = vmatprep.mubr.f32.mxu0 0.0
        %2003 = vmatmul.mubr.f32.gmra.mrb[0].mxu0 %v248
        %v2004 = vpop.f32.mrb[0].mxu0
        %v2005 = vadd.f32 %v852, %v2004
        %v2006 = vpop.f32.mrb[0].mxu0
        %v2007 = vadd.f32 %v852, %v2006
        %2008 = vmatprep.mubr.f32.mxu0 0.0
        %2009 = vmatmul.mubr.f32.gmra.mrb[0].mxu0 %v249
        %v2010 = vpop.f32.mrb[0].mxu0
        %v2011 = vadd.f32 %v857, %v2010
        %v2012 = vpop.f32.mrb[0].mxu0
        %v2013 = vadd.f32 %v857, %v2012
        %2014 = vmatprep.mubr.f32.mxu0 0.0
        %2015 = vmatmul.mubr.f32.gmra.mrb[0].mxu0 %v250
        %v2016 = vpop.f32.mrb[0].mxu0
        %v2017 = vadd.f32 %v862, %v2016
        %v2018 = vpop.f32.mrb[0].mxu0
        %v2019 = vadd.f32 %v862, %v2018
        %2020 = vmatprep.mubr.f32.mxu0 0.0
        %2021 = vmatmul.mubr.f32.gmra.mrb[0].mxu0 %v251
        %v2022 = vpop.f32.mrb[0].mxu0
        %v2023 = vadd.f32 %v867, %v2022
        %v2024 = vpop.f32.mrb[0].mxu0
        %v2025 = vadd.f32 %v867, %v2024
        %2026 = vmatprep.mubr.f32.mxu0 0.0
        %2027 = vmatmul.mubr.f32.gmra.mrb[0].mxu0 %v252
        %v2028 = vpop.f32.mrb[0].mxu0
        %v2029 = vadd.f32 %v872, %v2028
        %v2030 = vpop.f32.mrb[0].mxu0
        %v2031 = vadd.f32 %v872, %v2030
        %2032 = vmatprep.mubr.f32.mxu0 0.0
        %2033 = vmatmul.mubr.f32.gmra.mrb[0].mxu0 %v253
        %v2034 = vpop.f32.mrb[0].mxu0
        %v2035 = vadd.f32 %v877, %v2034
        %v2036 = vpop.f32.mrb[0].mxu0
        %v2037 = vadd.f32 %v877, %v2036
        %2038 = vmatprep.mubr.f32.mxu0 0.0
        %2039 = vmatmul.mubr.f32.gmra.mrb[0].mxu0 %v254
        %v2040 = vpop.f32.mrb[0].mxu0
        %v2041 = vadd.f32 %v882, %v2040
        %v2042 = vpop.f32.mrb[0].mxu0
        %v2043 = vadd.f32 %v882, %v2042
        %2044 = vmatprep.mubr.f32.mxu0 0.0
        %2045 = vmatmul.mubr.f32.gmra.mrb[0].mxu0 %v255
        %v2046 = vpop.f32.mrb[0].mxu0
        %v2047 = vadd.f32 %v887, %v2046
        %v2048 = vpop.f32.mrb[0].mxu0
        %v2049 = vadd.f32 %v887, %v2048
        %2050 = vmatprep.mubr.f32.mxu0 0.0
        %2051 = vmatmul.mubr.f32.gmra.mrb[0].mxu0 %v256
        %v2052 = vpop.f32.mrb[0].mxu0
        %v2053 = vadd.f32 %v892, %v2052
        %v2054 = vpop.f32.mrb[0].mxu0
        %v2055 = vadd.f32 %v892, %v2054
        %2056 = vmatprep.mubr.f32.mxu0 0.0
        %2057 = vmatmul.mubr.f32.gmra.mrb[0].mxu0 %v257
        %v2058 = vpop.f32.mrb[0].mxu0
        %v2059 = vadd.f32 %v897, %v2058
        %v2060 = vpop.f32.mrb[0].mxu0
        %v2061 = vadd.f32 %v897, %v2060
        %2062 = vmatprep.mubr.f32.mxu0 0.0
        %2063 = vmatmul.mubr.f32.gmra.mrb[0].mxu0 %v258
        %v2064 = vpop.f32.mrb[0].mxu0
        %v2065 = vadd.f32 %v902, %v2064
        %v2066 = vpop.f32.mrb[0].mxu0
        %v2067 = vadd.f32 %v902, %v2066
        %2068 = vmatprep.mubr.f32.mxu0 0.0
        %2069 = vmatmul.mubr.f32.gmra.mrb[0].mxu0 %v259
        %v2070 = vpop.f32.mrb[0].mxu0
        %v2071 = vadd.f32 %v907, %v2070
        %v2072 = vpop.f32.mrb[0].mxu0
        %v2073 = vadd.f32 %v907, %v2072
        %2074 = vmatprep.mubr.f32.mxu0 0.0
        %2075 = vmatmul.mubr.f32.gmra.mrb[0].mxu0 %v260
        %v2076 = vpop.f32.mrb[0].mxu0
        %v2077 = vadd.f32 %v912, %v2076
        %v2078 = vpop.f32.mrb[0].mxu0
        %v2079 = vadd.f32 %v912, %v2078
        %2080 = vmatprep.mubr.f32.mxu0 0.0
        %2081 = vmatmul.mubr.f32.gmra.mrb[0].mxu0 %v261
        %v2082 = vpop.f32.mrb[0].mxu0
        %v2083 = vadd.f32 %v917, %v2082
        %v2084 = vpop.f32.mrb[0].mxu0
        %v2085 = vadd.f32 %v917, %v2084
        %2086 = vdwg.mxu0
        %v2087 = vmax.f32 %v1993, %v1995
        %2088 = vmax.xlane.f32.xlu0 %v2087
        %v2089 = vpop.xlane.xlu0 %2088
        %v2090 = vmax.f32 %v1999, %v2001
        %2091 = vmax.xlane.f32.xlu0 %v2090
        %v2092 = vpop.xlane.xlu0 %2091
        %v2093 = vmax.f32 %v2005, %v2007
        %2094 = vmax.xlane.f32.xlu0 %v2093
        %v2095 = vpop.xlane.xlu0 %2094
        %v2096 = vmax.f32 %v2011, %v2013
        %2097 = vmax.xlane.f32.xlu0 %v2096
        %v2098 = vpop.xlane.xlu0 %2097
        %v2099 = vmax.f32 %v2017, %v2019
        %2100 = vmax.xlane.f32.xlu0 %v2099
        %v2101 = vpop.xlane.xlu0 %2100
        %v2102 = vmax.f32 %v2023, %v2025
        %2103 = vmax.xlane.f32.xlu0 %v2102
        %v2104 = vpop.xlane.xlu0 %2103
        %v2105 = vmax.f32 %v2029, %v2031
        %2106 = vmax.xlane.f32.xlu0 %v2105
        %v2107 = vpop.xlane.xlu0 %2106
        %v2108 = vmax.f32 %v2035, %v2037
        %2109 = vmax.xlane.f32.xlu0 %v2108
        %v2110 = vpop.xlane.xlu0 %2109
        %v2111 = vmax.f32 %v2041, %v2043
        %2112 = vmax.xlane.f32.xlu0 %v2111
        %v2113 = vpop.xlane.xlu0 %2112
        %v2114 = vmax.f32 %v2047, %v2049
        %2115 = vmax.xlane.f32.xlu0 %v2114
        %v2116 = vpop.xlane.xlu0 %2115
        %v2117 = vmax.f32 %v2053, %v2055
        %2118 = vmax.xlane.f32.xlu0 %v2117
        %v2119 = vpop.xlane.xlu0 %2118
        %v2120 = vmax.f32 %v2059, %v2061
        %2121 = vmax.xlane.f32.xlu0 %v2120
        %v2122 = vpop.xlane.xlu0 %2121
        %v2123 = vmax.f32 %v2065, %v2067
        %2124 = vmax.xlane.f32.xlu0 %v2123
        %v2125 = vpop.xlane.xlu0 %2124
        %v2126 = vmax.f32 %v2071, %v2073
        %2127 = vmax.xlane.f32.xlu0 %v2126
        %v2128 = vpop.xlane.xlu0 %2127
        %v2129 = vmax.f32 %v2077, %v2079
        %2130 = vmax.xlane.f32.xlu0 %v2129
        %v2131 = vpop.xlane.xlu0 %2130
        %v2132 = vmax.f32 %v2083, %v2085
        %2133 = vmax.xlane.f32.xlu0 %v2132
        %v2134 = vpop.xlane.xlu0 %2133
        %v2135 = vsub.f32 %v1993, %v2089
        %v2136 = vsub.f32 %v1995, %v2089
        %v2137 = vsub.f32 %v1999, %v2092
        %v2138 = vsub.f32 %v2001, %v2092
        %v2139 = vsub.f32 %v2005, %v2095
        %v2140 = vsub.f32 %v2007, %v2095
        %v2141 = vsub.f32 %v2011, %v2098
        %v2142 = vsub.f32 %v2013, %v2098
        %v2143 = vsub.f32 %v2017, %v2101
        %v2144 = vsub.f32 %v2019, %v2101
        %v2145 = vsub.f32 %v2023, %v2104
        %v2146 = vsub.f32 %v2025, %v2104
        %v2147 = vsub.f32 %v2029, %v2107
        %v2148 = vsub.f32 %v2031, %v2107
        %v2149 = vsub.f32 %v2035, %v2110
        %v2150 = vsub.f32 %v2037, %v2110
        %v2151 = vsub.f32 %v2041, %v2113
        %v2152 = vsub.f32 %v2043, %v2113
        %v2153 = vsub.f32 %v2047, %v2116
        %v2154 = vsub.f32 %v2049, %v2116
        %v2155 = vsub.f32 %v2053, %v2119
        %v2156 = vsub.f32 %v2055, %v2119
        %v2157 = vsub.f32 %v2059, %v2122
        %v2158 = vsub.f32 %v2061, %v2122
        %v2159 = vsub.f32 %v2065, %v2125
        %v2160 = vsub.f32 %v2067, %v2125
        %v2161 = vsub.f32 %v2071, %v2128
        %v2162 = vsub.f32 %v2073, %v2128
        %v2163 = vsub.f32 %v2077, %v2131
        %v2164 = vsub.f32 %v2079, %v2131
        %v2165 = vsub.f32 %v2083, %v2134
        %v2166 = vsub.f32 %v2085, %v2134
        %v2167 = vmul.f32 %v2135, 1.442695
        %v2168 = vpow.pop %v2167
        %v2169 = vmul.f32 %v2136, 1.442695
        %v2170 = vpow.pop %v2169
        %v2171 = vmul.f32 %v2137, 1.442695
        %v2172 = vpow.pop %v2171
        %v2173 = vmul.f32 %v2138, 1.442695
        %v2174 = vpow.pop %v2173
        %v2175 = vmul.f32 %v2139, 1.442695
        %v2176 = vpow.pop %v2175
        %v2177 = vmul.f32 %v2140, 1.442695
        %v2178 = vpow.pop %v2177
        %v2179 = vmul.f32 %v2141, 1.442695
        %v2180 = vpow.pop %v2179
        %v2181 = vmul.f32 %v2142, 1.442695
        %v2182 = vpow.pop %v2181
        %v2183 = vmul.f32 %v2143, 1.442695
        %v2184 = vpow.pop %v2183
        %v2185 = vmul.f32 %v2144, 1.442695
        %v2186 = vpow.pop %v2185
        %v2187 = vmul.f32 %v2145, 1.442695
        %v2188 = vpow.pop %v2187
        %v2189 = vmul.f32 %v2146, 1.442695
        %v2190 = vpow.pop %v2189
        %v2191 = vmul.f32 %v2147, 1.442695
        %v2192 = vpow.pop %v2191
        %v2193 = vmul.f32 %v2148, 1.442695
        %v2194 = vpow.pop %v2193
        %v2195 = vmul.f32 %v2149, 1.442695
        %v2196 = vpow.pop %v2195
        %v2197 = vmul.f32 %v2150, 1.442695
        %v2198 = vpow.pop %v2197
        %v2199 = vmul.f32 %v2151, 1.442695
        %v2200 = vpow.pop %v2199
        %v2201 = vmul.f32 %v2152, 1.442695
        %v2202 = vpow.pop %v2201
        %v2203 = vmul.f32 %v2153, 1.442695
        %v2204 = vpow.pop %v2203
        %v2205 = vmul.f32 %v2154, 1.442695
        %v2206 = vpow.pop %v2205
        %v2207 = vmul.f32 %v2155, 1.442695
        %v2208 = vpow.pop %v2207
        %v2209 = vmul.f32 %v2156, 1.442695
        %v2210 = vpow.pop %v2209
        %v2211 = vmul.f32 %v2157, 1.442695
        %v2212 = vpow.pop %v2211
        %v2213 = vmul.f32 %v2158, 1.442695
        %v2214 = vpow.pop %v2213
        %v2215 = vmul.f32 %v2159, 1.442695
        %v2216 = vpow.pop %v2215
        %v2217 = vmul.f32 %v2160, 1.442695
        %v2218 = vpow.pop %v2217
        %v2219 = vmul.f32 %v2161, 1.442695
        %v2220 = vpow.pop %v2219
        %v2221 = vmul.f32 %v2162, 1.442695
        %v2222 = vpow.pop %v2221
        %v2223 = vmul.f32 %v2163, 1.442695
        %v2224 = vpow.pop %v2223
        %v2225 = vmul.f32 %v2164, 1.442695
        %v2226 = vpow.pop %v2225
        %v2227 = vmul.f32 %v2165, 1.442695
        %v2228 = vpow.pop %v2227
        %v2229 = vmul.f32 %v2166, 1.442695
        %v2230 = vpow.pop %v2229
        %2231 = vmatprep.subr.mxu0 %v2170
        %2232 = vmatpush1.xpose.msra.mxu0 %v2168
        %2233 = vmatprep.subr.mxu0 %v2174
        %2234 = vmatpush1.xpose.msra.mxu0 %v2172
        %2235 = vmatprep.subr.mxu0 %v2178
        %2236 = vmatpush1.xpose.msra.mxu0 %v2176
        %2237 = vmatprep.subr.mxu0 %v2182
        %2238 = vmatpush1.xpose.msra.mxu0 %v2180
        %2239 = vmatprep.subr.mxu0 %v2186
        %2240 = vmatpush1.xpose.msra.mxu0 %v2184
        %2241 = vmatprep.subr.mxu0 %v2190
        %2242 = vmatpush1.xpose.msra.mxu0 %v2188
        %2243 = vmatprep.subr.mxu0 %v2194
        %2244 = vmatpush1.xpose.msra.mxu0 %v2192
        %2245 = vmatprep.subr.mxu0 %v2198
        %2246 = vmatpush1.xpose.msra.mxu0 %v2196
        %2247 = vmatprep.subr.mxu0 %v2202
        %2248 = vmatpush1.xpose.msra.mxu0 %v2200
        %2249 = vmatprep.subr.mxu0 %v2206
        %2250 = vmatpush1.xpose.msra.mxu0 %v2204
        %2251 = vmatprep.subr.mxu0 %v2210
        %2252 = vmatpush1.xpose.msra.mxu0 %v2208
        %2253 = vmatprep.subr.mxu0 %v2214
        %2254 = vmatpush1.xpose.msra.mxu0 %v2212
        %2255 = vmatprep.subr.mxu0 %v2218
        %2256 = vmatpush1.xpose.msra.mxu0 %v2216
        %2257 = vmatprep.subr.mxu0 %v2222
        %2258 = vmatpush1.xpose.msra.mxu0 %v2220
        %2259 = vmatprep.subr.mxu0 %v2226
        %2260 = vmatpush1.xpose.msra.mxu0 %v2224
        %2261 = vmatprep.subr.mxu0 %v2230
        %2262 = vmatpush1.xpose.msra.mxu0 %v2228
        %2263 = vmatprep.subr.mxu0 0.0
        %2264 = vmatpush1.xpose.msra.mxu0 0.0
        %2265 = vmatprep.subr.mxu0 0.0
        %2266 = vmatpush1.xpose.msra.mxu0 0.0
        %2267 = vmatprep.subr.mxu0 0.0
        %2268 = vmatpush1.xpose.msra.mxu0 0.0
        %2269 = vmatprep.subr.mxu0 0.0
        %2270 = vmatpush1.xpose.msra.mxu0 0.0
        %2271 = vmatprep.subr.mxu0 0.0
        %2272 = vmatpush1.xpose.msra.mxu0 0.0
        %2273 = vmatprep.subr.mxu0 0.0
        %2274 = vmatpush1.xpose.msra.mxu0 0.0
        %2275 = vmatprep.subr.mxu0 0.0
        %2276 = vmatpush1.xpose.msra.mxu0 0.0
        %2277 = vmatprep.subr.mxu0 0.0
        %2278 = vmatpush1.xpose.msra.mxu0 0.0
        %2279 = vmatprep.subr.mxu0 0.0
        %2280 = vmatpush1.xpose.msra.mxu0 0.0
        %2281 = vmatprep.subr.mxu0 0.0
        %2282 = vmatpush1.xpose.msra.mxu0 0.0
        %2283 = vmatprep.subr.mxu0 0.0
        %2284 = vmatpush1.xpose.msra.mxu0 0.0
        %2285 = vmatprep.subr.mxu0 0.0
        %2286 = vmatpush1.xpose.msra.mxu0 0.0
        %2287 = vmatprep.subr.mxu0 0.0
        %2288 = vmatpush1.xpose.msra.mxu0 0.0
        %2289 = vmatprep.subr.mxu0 0.0
        %2290 = vmatpush1.xpose.msra.mxu0 0.0
        %2291 = vmatprep.subr.mxu0 0.0
        %2292 = vmatpush1.xpose.msra.mxu0 0.0
        %2293 = vmatprep.subr.mxu0 0.0
        %2294 = vmatpush1.xpose.msra.mxu0 0.0
        %2295 = vmatprep.mubr.f32.mxu0 %v1479
        %2296 = vmatmul.mubr.f32.gmra.mrb[0].mxu0 %v1478
        %v2297 = vpop.f32.mrb[0].mxu0
        %v2298 = vadd.f32 0.0, %v2297
        %v2299 = vpop.f32.mrb[0].mxu0
        %2300 = vmatprep.mubr.f32.mxu0 %v1481
        %2301 = vmatmul.mubr.f32.gmra.mrb[0].mxu0 %v1480
        %v2302 = vpop.f32.mrb[0].mxu0
        %v2303 = vadd.f32 0.0, %v2302
        %v2304 = vpop.f32.mrb[0].mxu0
        %2305 = vmatprep.mubr.f32.mxu0 %v1483
        %2306 = vmatmul.mubr.f32.gmra.mrb[0].mxu0 %v1482
        %v2307 = vpop.f32.mrb[0].mxu0
        %v2308 = vadd.f32 0.0, %v2307
        %v2309 = vpop.f32.mrb[0].mxu0
        %2310 = vmatprep.mubr.f32.mxu0 %v1485
        %2311 = vmatmul.mubr.f32.gmra.mrb[0].mxu0 %v1484
        %v2312 = vpop.f32.mrb[0].mxu0
        %v2313 = vadd.f32 0.0, %v2312
        %v2314 = vpop.f32.mrb[0].mxu0
        %2315 = vmatprep.mubr.f32.mxu0 %v1487
        %2316 = vmatmul.mubr.f32.gmra.mrb[0].mxu0 %v1486
        %v2317 = vpop.f32.mrb[0].mxu0
        %v2318 = vadd.f32 0.0, %v2317
        %v2319 = vpop.f32.mrb[0].mxu0
        %2320 = vmatprep.mubr.f32.mxu0 %v1489
        %2321 = vmatmul.mubr.f32.gmra.mrb[0].mxu0 %v1488
        %v2322 = vpop.f32.mrb[0].mxu0
        %v2323 = vadd.f32 0.0, %v2322
        %v2324 = vpop.f32.mrb[0].mxu0
        %2325 = vmatprep.mubr.f32.mxu0 %v1491
        %2326 = vmatmul.mubr.f32.gmra.mrb[0].mxu0 %v1490
        %v2327 = vpop.f32.mrb[0].mxu0
        %v2328 = vadd.f32 0.0, %v2327
        %v2329 = vpop.f32.mrb[0].mxu0
        %2330 = vmatprep.mubr.f32.mxu0 %v1493
        %2331 = vmatmul.mubr.f32.gmra.mrb[0].mxu0 %v1492
        %v2332 = vpop.f32.mrb[0].mxu0
        %v2333 = vadd.f32 0.0, %v2332
        %v2334 = vpop.f32.mrb[0].mxu0
        %2335 = vmatprep.mubr.f32.mxu0 %v1495
        %2336 = vmatmul.mubr.f32.gmra.mrb[0].mxu0 %v1494
        %v2337 = vpop.f32.mrb[0].mxu0
        %v2338 = vadd.f32 0.0, %v2337
        %v2339 = vpop.f32.mrb[0].mxu0
        %2340 = vmatprep.mubr.f32.mxu0 %v1497
        %2341 = vmatmul.mubr.f32.gmra.mrb[0].mxu0 %v1496
        %v2342 = vpop.f32.mrb[0].mxu0
        %v2343 = vadd.f32 0.0, %v2342
        %v2344 = vpop.f32.mrb[0].mxu0
        %2345 = vmatprep.mubr.f32.mxu0 %v1499
        %2346 = vmatmul.mubr.f32.gmra.mrb[0].mxu0 %v1498
        %v2347 = vpop.f32.mrb[0].mxu0
        %v2348 = vadd.f32 0.0, %v2347
        %v2349 = vpop.f32.mrb[0].mxu0
        %2350 = vmatprep.mubr.f32.mxu0 %v1501
        %2351 = vmatmul.mubr.f32.gmra.mrb[0].mxu0 %v1500
        %v2352 = vpop.f32.mrb[0].mxu0
        %v2353 = vadd.f32 0.0, %v2352
        %v2354 = vpop.f32.mrb[0].mxu0
        %2355 = vmatprep.mubr.f32.mxu0 %v1503
        %2356 = vmatmul.mubr.f32.gmra.mrb[0].mxu0 %v1502
        %v2357 = vpop.f32.mrb[0].mxu0
        %v2358 = vadd.f32 0.0, %v2357
        %v2359 = vpop.f32.mrb[0].mxu0
        %2360 = vmatprep.mubr.f32.mxu0 %v1505
        %2361 = vmatmul.mubr.f32.gmra.mrb[0].mxu0 %v1504
        %v2362 = vpop.f32.mrb[0].mxu0
        %v2363 = vadd.f32 0.0, %v2362
        %v2364 = vpop.f32.mrb[0].mxu0
        %2365 = vmatprep.mubr.f32.mxu0 %v1507
        %2366 = vmatmul.mubr.f32.gmra.mrb[0].mxu0 %v1506
        %v2367 = vpop.f32.mrb[0].mxu0
        %v2368 = vadd.f32 0.0, %v2367
        %v2369 = vpop.f32.mrb[0].mxu0
        %2370 = vmatprep.mubr.f32.mxu0 %v1509
        %2371 = vmatmul.mubr.f32.gmra.mrb[0].mxu0 %v1508
        %v2372 = vpop.f32.mrb[0].mxu0
        %v2373 = vadd.f32 0.0, %v2372
        %v2374 = vpop.f32.mrb[0].mxu0
        %2375 = vdwg.mxu0
        %2376 = vmatprep.subr.mxu0 %v2170
        %2377 = vmatpush1.xpose.msra.mxu0 %v2168
        %2378 = vmatprep.subr.mxu0 %v2174
        %2379 = vmatpush1.xpose.msra.mxu0 %v2172
        %2380 = vmatprep.subr.mxu0 %v2178
        %2381 = vmatpush1.xpose.msra.mxu0 %v2176
        %2382 = vmatprep.subr.mxu0 %v2182
        %2383 = vmatpush1.xpose.msra.mxu0 %v2180
        %2384 = vmatprep.subr.mxu0 %v2186
        %2385 = vmatpush1.xpose.msra.mxu0 %v2184
        %2386 = vmatprep.subr.mxu0 %v2190
        %2387 = vmatpush1.xpose.msra.mxu0 %v2188
        %2388 = vmatprep.subr.mxu0 %v2194
        %2389 = vmatpush1.xpose.msra.mxu0 %v2192
        %2390 = vmatprep.subr.mxu0 %v2198
        %2391 = vmatpush1.xpose.msra.mxu0 %v2196
        %2392 = vmatprep.subr.mxu0 %v2202
        %2393 = vmatpush1.xpose.msra.mxu0 %v2200
        %2394 = vmatprep.subr.mxu0 %v2206
        %2395 = vmatpush1.xpose.msra.mxu0 %v2204
        %2396 = vmatprep.subr.mxu0 %v2210
        %2397 = vmatpush1.xpose.msra.mxu0 %v2208
        %2398 = vmatprep.subr.mxu0 %v2214
        %2399 = vmatpush1.xpose.msra.mxu0 %v2212
        %2400 = vmatprep.subr.mxu0 %v2218
        %2401 = vmatpush1.xpose.msra.mxu0 %v2216
        %2402 = vmatprep.subr.mxu0 %v2222
        %2403 = vmatpush1.xpose.msra.mxu0 %v2220
        %2404 = vmatprep.subr.mxu0 %v2226
        %2405 = vmatpush1.xpose.msra.mxu0 %v2224
        %2406 = vmatprep.subr.mxu0 %v2230
        %2407 = vmatpush1.xpose.msra.mxu0 %v2228
        %2408 = vmatprep.subr.mxu0 0.0
        %2409 = vmatpush1.xpose.msra.mxu0 0.0
        %2410 = vmatprep.subr.mxu0 0.0
        %2411 = vmatpush1.xpose.msra.mxu0 0.0
        %2412 = vmatprep.subr.mxu0 0.0
        %2413 = vmatpush1.xpose.msra.mxu0 0.0
        %2414 = vmatprep.subr.mxu0 0.0
        %2415 = vmatpush1.xpose.msra.mxu0 0.0
        %2416 = vmatprep.subr.mxu0 0.0
        %2417 = vmatpush1.xpose.msra.mxu0 0.0
        %2418 = vmatprep.subr.mxu0 0.0
        %2419 = vmatpush1.xpose.msra.mxu0 0.0
        %2420 = vmatprep.subr.mxu0 0.0
        %2421 = vmatpush1.xpose.msra.mxu0 0.0
        %2422 = vmatprep.subr.mxu0 0.0
        %2423 = vmatpush1.xpose.msra.mxu0 0.0
        %2424 = vmatprep.subr.mxu0 0.0
        %2425 = vmatpush1.xpose.msra.mxu0 0.0
        %2426 = vmatprep.subr.mxu0 0.0
        %2427 = vmatpush1.xpose.msra.mxu0 0.0
        %2428 = vmatprep.subr.mxu0 0.0
        %2429 = vmatpush1.xpose.msra.mxu0 0.0
        %2430 = vmatprep.subr.mxu0 0.0
        %2431 = vmatpush1.xpose.msra.mxu0 0.0
        %2432 = vmatprep.subr.mxu0 0.0
        %2433 = vmatpush1.xpose.msra.mxu0 0.0
        %2434 = vmatprep.subr.mxu0 0.0
        %2435 = vmatpush1.xpose.msra.mxu0 0.0
        %2436 = vmatprep.subr.mxu0 0.0
        %2437 = vmatpush1.xpose.msra.mxu0 0.0
        %2438 = vmatprep.subr.mxu0 0.0
        %2439 = vmatpush1.xpose.msra.mxu0 0.0
        %2440 = vmatprep.mubr.f32.mxu0 1.0
        %2441 = vmatmul.mubr.f32.gmra.mrb[0].mxu0 1.0
        %v2442 = vpop.f32.mrb[0].mxu0
        %v2443 = vadd.f32 0.0, %v2442
        %v2444 = vpop.f32.mrb[0].mxu0
        %2445 = vdwg.mxu0
        %v2446 = vrcp.pop %v2443
        %v2447 = vmul.f32 1.0, %v2446
        %v2448 = vlaneseq
        %v2449 = vshrl.u32 %v2448, 7
        %v2450 = vsub.s32 0, %v2449
        %v2451 = vrot.slane %v2447, %v2450
        %v2452 = vmul.f32 %v2298, %v2451
        %v2453 = vmul.f32 %v2303, %v2451
        %v2454 = vmul.f32 %v2308, %v2451
        %v2455 = vmul.f32 %v2313, %v2451
        %v2456 = vmul.f32 %v2318, %v2451
        %v2457 = vmul.f32 %v2323, %v2451
        %v2458 = vmul.f32 %v2328, %v2451
        %v2459 = vmul.f32 %v2333, %v2451
        %v2460 = vmul.f32 %v2338, %v2451
        %v2461 = vmul.f32 %v2343, %v2451
        %v2462 = vmul.f32 %v2348, %v2451
        %v2463 = vmul.f32 %v2353, %v2451
        %v2464 = vmul.f32 %v2358, %v2451
        %v2465 = vmul.f32 %v2363, %v2451
        %v2466 = vmul.f32 %v2368, %v2451
        %v2467 = vmul.f32 %v2373, %v2451
        %s2468 = scalar_lea.vmem %s243, 128 [#allocation5]
        %2469 = vst [vmem:[%s2468] sm:$0xff] %v2452
        %2470 = vst [vmem:[%s2468 + $0x8] sm:$0xff] %v2453
        %2471 = vst [vmem:[%s2468 + $0x10] sm:$0xff] %v2454
        %2472 = vst [vmem:[%s2468 + $0x18] sm:$0xff] %v2455
        %2473 = vst [vmem:[%s2468 + $0x20] sm:$0xff] %v2456
        %2474 = vst [vmem:[%s2468 + $0x28] sm:$0xff] %v2457
        %2475 = vst [vmem:[%s2468 + $0x30] sm:$0xff] %v2458
        %2476 = vst [vmem:[%s2468 + $0x38] sm:$0xff] %v2459
        %2477 = vst [vmem:[%s2468 + $0x40] sm:$0xff] %v2460
        %2478 = vst [vmem:[%s2468 + $0x48] sm:$0xff] %v2461
        %2479 = vst [vmem:[%s2468 + $0x50] sm:$0xff] %v2462
        %2480 = vst [vmem:[%s2468 + $0x58] sm:$0xff] %v2463
        %2481 = vst [vmem:[%s2468 + $0x60] sm:$0xff] %v2464
        %2482 = vst [vmem:[%s2468 + $0x68] sm:$0xff] %v2465
        %2483 = vst [vmem:[%s2468 + $0x70] sm:$0xff] %v2466
        %2484 = vst [vmem:[%s2468 + $0x78] sm:$0xff] %v2467
        %s2485 = sand.u32 %s140, 1
        %s2486 = scalar_lea.sflag [#allocation4], %s2485
        %s2487 = sand.u32 %s140, 1
        %s2488 = smul.addr %s2487, 256
        %s2489 = scalar_lea.vmem [#allocation5], %s2488
        // Predicated region
        $region45: #{tpu_custom_call.1} parent=39 // pred_check
          %p2490 = pneg %p150
        $region46: #{tpu_custom_call.1} parent=39 // pred_check_branch
          %2492 = sbr.rel (%p2490) target = $region48
        $region47: #{tpu_custom_call.1} parent=39 // pred_region
          %s2493 = smul.u32 2, %s22
          %s2495 = ssub.s32 4096, 4096
          %2496 = vsyncadd %s2486, %s2495
          %s2497 = smul.addr %s2493, 16
          %s2498 = smul.addr %s2497, 128
          %s2499 = scalar_lea.hbm %s5, %s2498
          %s2500 = sshll.u32 %s2489, 4
          %s2501 = int_to_ptr.vmem [resolvable:$true] %s2500
          %2506 = dma.vmem_to_hbm [thread:$0]  %s2501, 4096, %s2499, %s2486, 128, 128, 8
        $region48: #{tpu_custom_call.1} parent=39 // pred_fallthru
          _
      $region40: #{tpu_custom_call.1} parent=5 // pred_fallthru
        _
      %p2507 = scmp.le.s32.totalorder 2, %s17
      // Predicated region
      $region49: #{tpu_custom_call.1} parent=5 // pred_check
        %p2508 = pneg %p2507
      $region50: #{tpu_custom_call.1} parent=5 // pred_check_branch
        %2510 = sbr.rel (%p2508) target = $region52
      $region51: #{tpu_custom_call.1} parent=5 // pred_region
        %s2511 = ssub.s32 %s17, 2
        // Predicated region
        $region53: #{tpu_custom_call.1} parent=51 // pred_check
          %p2512 = pneg %p156
        $region54: #{tpu_custom_call.1} parent=51 // pred_check_branch
          %2514 = sbr.rel (%p2512) target = $region56
        $region55: #{tpu_custom_call.1} parent=51 // pred_region
          %s2515 = sand.u32 %s141, 1
          %s2516 = scalar_lea.sflag [#allocation4], %s2515
          %s2517 = sand.u32 %s141, 1
          %s2518 = smul.addr %s2517, 256
          %s2519 = scalar_lea.vmem [#allocation5], %s2518
          %2520 = dma.done %s2516, 4096
        $region56: #{tpu_custom_call.1} parent=51 // pred_fallthru
          _
      $region52: #{tpu_custom_call.1} parent=5 // pred_fallthru
        _
    $region6: #{tpu_custom_call.1} parent=1 // loop_footer
      %s21 = sadd.s32 1, %s17
    $region7: #{tpu_custom_call.1} parent=1 // loop_footer_branch
      %16 = sbr.rel target = $region3
    $region8: #{tpu_custom_call.1} parent=1 // loop_exit
      _
    %2521 = vsyncpa [#allocation3], 1
    %s2522 = scalar_lea.sflag [#allocation3], 1
    %2523 = vsyncpa %s2522, 1
    %2524 = vsyncpa [#allocation4], 1
    %s2525 = scalar_lea.sflag [#allocation4], 1
    %2526 = vsyncpa %s2525, 1

</llo_original>
